<compile_context>
chip_gen: v5e
topology: v5e:2x2
jax: 0.10.0
libtpu: 0.0.40
codegen_flags: <defaults>
</compile_context>

<pallas_src>
import jax
import jax.numpy as jnp
from jax.experimental import pallas as pl
from jax.experimental.pallas import tpu as pltpu

FEATURE_DIM = 4
LATENT_DIM = 100
MAX_LEN = 300
HIDDEN = 512
OUT_DIM = MAX_LEN * FEATURE_DIM          # 1200
OUT_PAD = 1280                            # W2 / accumulator lane-aligned width

MAX_TILE_B = 512                          # rows per grid step (see header)
VMEM_LIMIT_BYTES = 32 * 1024 * 1024


def _round_up(x, m):
    return ((x + m - 1) // m) * m


def _generator_kernel(z_ref, w1_ref, b1_ref, w2_ref, b2_ref, out_ref):
    # z tile: (TILE_B, 100) f32.  Weights are bf16 (VMEM-resident, half the
    # bytes); MXU does bf16 x bf16 with f32 accumulation.  All element-wise
    # math (bias, ReLU, tanh) is f32 so it is safe on v5e (no bf16 VPU/EUP).
    z = z_ref[...].astype(jnp.bfloat16)                        # (TILE_B, 100)
    h = jnp.dot(z, w1_ref[...],
                preferred_element_type=jnp.float32)            # (TILE_B, 512) f32
    h = jnp.maximum(h + b1_ref[...], 0.0)                      # bias + ReLU, f32
    o = jnp.dot(h.astype(jnp.bfloat16), w2_ref[...],
                preferred_element_type=jnp.float32)            # (TILE_B, 1280) f32
    y = jnp.tanh(o + b2_ref[...])                              # bias + Tanh, f32
    # Drop the 80 zero-padded lanes at store time (masked tail vst only).
    out_ref[...] = y[:, :OUT_DIM].astype(out_ref.dtype)


def pack_params(w1, b1, w2, b2):
    """Cast weights to bf16 and pad W2/b2 columns 1200 -> 1280 (do once).

    The padded columns are zero, the kernel slices them off before the store,
    so the result is exact w.r.t. the unpadded math."""
    w1p = jnp.asarray(w1, jnp.bfloat16)                               # (100, 512)
    b1p = jnp.asarray(b1, jnp.float32).reshape(1, HIDDEN)             # (1, 512)
    w2p = jnp.pad(jnp.asarray(w2, jnp.float32),
                  ((0, 0), (0, OUT_PAD - OUT_DIM))).astype(jnp.bfloat16)  # (512, 1280)
    b2p = jnp.pad(jnp.asarray(b2, jnp.float32).reshape(1, OUT_DIM),
                  ((0, 0), (0, OUT_PAD - OUT_DIM)))                   # (1, 1280)
    return w1p, b1p, w2p, b2p


def generator_forward(z, w1p, b1p, w2p, b2p, out_dtype=jnp.float32):
    """z: (B, LATENT_DIM) f32, packed params -> (B, MAX_LEN, FEATURE_DIM)."""
    B = z.shape[0]

    # Balanced, sublane-aligned batch tiles; force >= 2 grid steps when the
    # batch is big enough so v7x megacore can shard it across both TCs.
    n_tiles = pl.cdiv(B, MAX_TILE_B)
    if n_tiles == 1 and B >= 16:
        n_tiles = 2
    tile_b = _round_up(pl.cdiv(B, n_tiles), 8)
    b_pad = n_tiles * tile_b

    z_in = jnp.asarray(z, jnp.float32)
    if b_pad != B:
        z_in = jnp.pad(z_in, ((0, b_pad - B), (0, 0)))

    out_flat = pl.pallas_call(
        _generator_kernel,
        out_shape=jax.ShapeDtypeStruct((b_pad, OUT_DIM), out_dtype),
        grid=(n_tiles,),
        in_specs=[
            pl.BlockSpec((tile_b, LATENT_DIM), lambda i: (i, 0)),   # z tile
            pl.BlockSpec((LATENT_DIM, HIDDEN), lambda i: (0, 0)),   # W1 (resident)
            pl.BlockSpec((1, HIDDEN), lambda i: (0, 0)),            # b1 (resident)
            pl.BlockSpec((HIDDEN, OUT_PAD), lambda i: (0, 0)),      # W2 (resident)
            pl.BlockSpec((1, OUT_PAD), lambda i: (0, 0)),           # b2 (resident)
        ],
        out_specs=pl.BlockSpec((tile_b, OUT_DIM), lambda i: (i, 0)),
        compiler_params=pltpu.CompilerParams(
            dimension_semantics=("parallel",),
            vmem_limit_bytes=VMEM_LIMIT_BYTES),
    )(z_in, w1p, b1p, w2p, b2p)

    # Contiguous row slice + free view; matches torch's out.view(-1, 300, 4).
    return out_flat[:B].reshape(B, MAX_LEN, FEATURE_DIM)


def init_params(key):
    """Deterministic synthetic parameters with nn.Linear shapes.

    Stored as (in, out) so the kernel does x @ W + b (equivalent to torch's
    x @ W_t.T + b with W_t of shape (out, in))."""
    k1, k2, k3, k4 = jax.random.split(key, 4)
    lim1 = 1.0 / jnp.sqrt(LATENT_DIM)
    lim2 = 1.0 / jnp.sqrt(HIDDEN)
    w1 = jax.random.uniform(k1, (LATENT_DIM, HIDDEN), jnp.float32, -lim1, lim1)
    b1 = jax.random.uniform(k2, (1, HIDDEN), jnp.float32, -lim1, lim1)
    w2 = jax.random.uniform(k3, (HIDDEN, OUT_DIM), jnp.float32, -lim2, lim2)
    b2 = jax.random.uniform(k4, (1, OUT_DIM), jnp.float32, -lim2, lim2)
    return w1, b1, w2, b2


def reference_forward(z, w1, b1, w2, b2):
    h = jnp.maximum(z @ w1 + b1, 0.0)
    return jnp.tanh(h @ w2 + b2).reshape(-1, MAX_LEN, FEATURE_DIM)


if __name__ == "__main__":
    key = jax.random.PRNGKey(0)
    kz, kp = jax.random.split(key)

    B = 2
    z = jax.random.normal(kz, (B, LATENT_DIM), dtype=jnp.float32)
    w1, b1, w2, b2 = init_params(kp)
    w1p, b1p, w2p, b2p = pack_params(w1, b1, w2, b2)

    out = generator_forward(z, w1p, b1p, w2p, b2p)
    out = jax.block_until_ready(out)

    assert out.shape == (B, MAX_LEN, FEATURE_DIM), out.shape

    # bf16 weight streaming -> looser tolerance vs the pure-f32 reference
    # (tanh output is bounded in [-1, 1], so absolute error stays small).
    ref = reference_forward(z, w1, b1, w2, b2)
    assert jnp.allclose(out, ref, atol=2e-2, rtol=2e-2), "mismatch vs reference"

    print("KERNEL_OK")
</pallas_src>

<mosaic_0001>
module attributes {stable_mosaic.version = 11 : i64} {
  func.func @_generator_kernel(%arg0: i32, %arg1: memref<8x100xf32, #tpu.memory_space<vmem>>, %arg2: memref<100x512xbf16, #tpu.memory_space<vmem>>, %arg3: memref<1x512xf32, #tpu.memory_space<vmem>>, %arg4: memref<512x1280xbf16, #tpu.memory_space<vmem>>, %arg5: memref<1x1280xf32, #tpu.memory_space<vmem>>, %arg6: memref<8x1200xf32, #tpu.memory_space<vmem>>) attributes {dimension_semantics = [#tpu.dimension_semantics<parallel>], iteration_bounds = array<i64: 1>, scalar_prefetch = 0 : i64, scratch_operands = 0 : i64, tpu.core_type = #tpu.core_type<tc>, window_params = [{transform_indices = @transform_0, window_bounds = array<i64: 8, 100>}, {pipeline_mode = #tpu.pipeline_mode<synchronous>, transform_indices = @transform_1, window_bounds = array<i64: 100, 512>}, {pipeline_mode = #tpu.pipeline_mode<synchronous>, transform_indices = @transform_2, window_bounds = array<i64: 1, 512>}, {pipeline_mode = #tpu.pipeline_mode<synchronous>, transform_indices = @transform_3, window_bounds = array<i64: 512, 1280>}, {pipeline_mode = #tpu.pipeline_mode<synchronous>, transform_indices = @transform_4, window_bounds = array<i64: 1, 1280>}, {transform_indices = @transform_5, window_bounds = array<i64: 8, 1200>}]} {
    %c0 = arith.constant 0 : index
    %c0_0 = arith.constant 0 : index
    %0 = vector.load %arg1[%c0, %c0_0] : memref<8x100xf32, #tpu.memory_space<vmem>>, vector<8x100xf32>
    %1 = arith.truncf %0 : vector<8x100xf32> to vector<8x100xbf16>
    %c0_1 = arith.constant 0 : index
    %c0_2 = arith.constant 0 : index
    %2 = vector.load %arg2[%c0_1, %c0_2] : memref<100x512xbf16, #tpu.memory_space<vmem>>, vector<100x512xbf16>
    %cst = arith.constant dense<0.000000e+00> : vector<8x512xf32>
    %3 = tpu.matmul %1, %2, %cst {dimension_numbers = #tpu.dot_dimension_numbers<[1], [0], [0], [1], [0, 0, 1, 1], [], []>} : vector<8x100xbf16>, vector<100x512xbf16>, vector<8x512xf32> -> vector<8x512xf32>
    %c0_3 = arith.constant 0 : index
    %c0_4 = arith.constant 0 : index
    %4 = vector.load %arg3[%c0_3, %c0_4] : memref<1x512xf32, #tpu.memory_space<vmem>>, vector<1x512xf32>
    %5 = vector.broadcast %4 : vector<1x512xf32> to vector<8x512xf32>
    %6 = arith.addf %3, %5 : vector<8x512xf32>
    %cst_5 = arith.constant 0.000000e+00 : f32
    %7 = vector.broadcast %cst_5 : f32 to vector<8x512xf32>
    %8 = arith.maximumf %6, %7 : vector<8x512xf32>
    %9 = arith.truncf %8 : vector<8x512xf32> to vector<8x512xbf16>
    %c0_6 = arith.constant 0 : index
    %c0_7 = arith.constant 0 : index
    %10 = vector.load %arg4[%c0_6, %c0_7] : memref<512x1280xbf16, #tpu.memory_space<vmem>>, vector<512x1280xbf16>
    %cst_8 = arith.constant dense<0.000000e+00> : vector<8x1280xf32>
    %11 = tpu.matmul %9, %10, %cst_8 {dimension_numbers = #tpu.dot_dimension_numbers<[1], [0], [0], [1], [0, 0, 1, 1], [], []>} : vector<8x512xbf16>, vector<512x1280xbf16>, vector<8x1280xf32> -> vector<8x1280xf32>
    %c0_9 = arith.constant 0 : index
    %c0_10 = arith.constant 0 : index
    %12 = vector.load %arg5[%c0_9, %c0_10] : memref<1x1280xf32, #tpu.memory_space<vmem>>, vector<1x1280xf32>
    %13 = vector.broadcast %12 : vector<1x1280xf32> to vector<8x1280xf32>
    %14 = arith.addf %11, %13 : vector<8x1280xf32>
    %15 = math.tanh %14 : vector<8x1280xf32>
    %16 = vector.extract_strided_slice %15 {offsets = [0, 0], sizes = [8, 1200], strides = [1, 1]} : vector<8x1280xf32> to vector<8x1200xf32>
    %c0_11 = arith.constant 0 : index
    %c0_12 = arith.constant 0 : index
    %17 = vector.load %arg6[%c0_11, %c0_12] : memref<8x1200xf32, #tpu.memory_space<vmem>>, vector<8x1200xf32>
    tpu.vector_store %arg6[%c0_11, %c0_12], %16 {strides = array<i32>} : memref<8x1200xf32, #tpu.memory_space<vmem>>, vector<8x1200xf32>,
    return
  }
  func.func @transform_0(%arg0: i32) -> (i32, i32) {
    %c0_i32 = arith.constant 0 : i32
    %c0_i32_0 = arith.constant 0 : i32
    return %arg0, %c0_i32 : i32, i32
  }
  func.func @transform_1(%arg0: i32) -> (i32, i32) {
    %c0_i32 = arith.constant 0 : i32
    %c0_i32_0 = arith.constant 0 : i32
    %c0_i32_1 = arith.constant 0 : i32
    return %c0_i32, %c0_i32_0 : i32, i32
  }
  func.func @transform_2(%arg0: i32) -> (i32, i32) {
    %c0_i32 = arith.constant 0 : i32
    %c0_i32_0 = arith.constant 0 : i32
    %c0_i32_1 = arith.constant 0 : i32
    return %c0_i32, %c0_i32_0 : i32, i32
  }
  func.func @transform_3(%arg0: i32) -> (i32, i32) {
    %c0_i32 = arith.constant 0 : i32
    %c0_i32_0 = arith.constant 0 : i32
    %c0_i32_1 = arith.constant 0 : i32
    return %c0_i32, %c0_i32_0 : i32, i32
  }
  func.func @transform_4(%arg0: i32) -> (i32, i32) {
    %c0_i32 = arith.constant 0 : i32
    %c0_i32_0 = arith.constant 0 : i32
    %c0_i32_1 = arith.constant 0 : i32
    return %c0_i32, %c0_i32_0 : i32, i32
  }
  func.func @transform_5(%arg0: i32) -> (i32, i32) {
    %c0_i32 = arith.constant 0 : i32
    %c0_i32_0 = arith.constant 0 : i32
    return %arg0, %c0_i32 : i32, i32
  }
}

</mosaic_0001>

<llo_original>
// kernel: tpu_custom_call.1
$region0: #{tpu_custom_call.1}
  #allocation0 [shape = 'u32[]', space=smem, size = 0x4, offset = 0x4, fixed_abs, tag = 'smem constant byte address 0x4 - core index']
  #allocation1 [shape = 'u32[72,128]{1,0:T(1,128)}', space=vmem, size = 0x9000, scoped, tag = 'internal scratch']
  %s0 = inlined_call_operand.hbm [shape: f32[8,100], index: 0, kind: input, shape index: {}]
  %s1 = inlined_call_operand.hbm [shape: bf16[100,512], index: 1, kind: input, shape index: {}]
  %s2 = inlined_call_operand.hbm [shape: f32[1,512], index: 2, kind: input, shape index: {}]
  %s3 = inlined_call_operand.hbm [shape: bf16[512,1280], index: 3, kind: input, shape index: {}]
  %s4 = inlined_call_operand.hbm [shape: f32[1,1280], index: 4, kind: input, shape index: {}]
  %s5 = inlined_call_operand.hbm [shape: f32[8,1200], index: 5, kind: output, shape index: {}]
  %s6 = sld [smem:[#allocation0]]
  $region50: #{tpu_custom_call.1} parent=0
    _
  %s8 = ssub.s32 1, %s6
  %s9 = scalar_select 0, %s8, %s6
  $region1: #{tpu_custom_call.1} parent=0
    #allocation2 [shape = 'u8[4096]{0}', space=vmem, size = 0x1000, scoped, tag = 'input window, operand 0, single buffered']
    #allocation3 [shape = 's32[1]{0}', space=sflag, size = 0x4, scoped, tag = 'scoped memory for tpu_custom_call.1']
    #allocation4 [shape = 's32[1]{0}', space=sflag, size = 0x4, scoped, tag = 'scoped memory for tpu_custom_call.1']
    #allocation5 [shape = 'u8[106496]{0}', space=vmem, size = 0x1a000, scoped, tag = 'input window, operand 1, single buffered']
    #allocation6 [shape = 's32[1]{0}', space=sflag, size = 0x4, scoped, tag = 'scoped memory for tpu_custom_call.1']
    #allocation7 [shape = 'u8[2048]{0}', space=vmem, size = 0x800, scoped, tag = 'input window, operand 2, single buffered']
    #allocation8 [shape = 'u8[1310720]{0}', space=vmem, size = 0x140000, scoped, tag = 'input window, operand 3, single buffered']
    #allocation9 [shape = 's32[1]{0}', space=sflag, size = 0x4, scoped, tag = 'scoped memory for tpu_custom_call.1']
    #allocation10 [shape = 'u8[5120]{0}', space=vmem, size = 0x1400, scoped, tag = 'input window, operand 4, single buffered']
    #allocation11 [shape = 'u8[40960]{0}', space=vmem, size = 0xa000, scoped, tag = 'output window, operand 0, single buffered']
    %10 = vsyncpa [#allocation3], 0
    %11 = vsyncpa [#allocation6], 0
    %12 = vsyncpa [#allocation9], 0
    %13 = vsyncpa [#allocation4], 0
    // Predicated region
    $region2: #{tpu_custom_call.1} parent=1 // pred_check
      _
    $region3: #{tpu_custom_call.1} parent=1 // pred_check_branch
      %15 = sbr.rel (0) target = $region5
    $region4: #{tpu_custom_call.1} parent=1 // pred_region
      %17 = vsyncadd [#allocation3], 0
      %s19 = sshll.u32 %s0, 4
      %s20 = int_to_ptr.hbm [resolvable:$true] %s19
      %s21 = sshll.u32 [#allocation2], 4
      %s22 = int_to_ptr.vmem [resolvable:$true] %s21
      %24 = dma.hbm_to_vmem [thread:$0]  %s20, 128, %s22, [#allocation3]
    $region5: #{tpu_custom_call.1} parent=1 // pred_fallthru
      _
    // Predicated region
    $region6: #{tpu_custom_call.1} parent=1 // pred_check
      _
    $region7: #{tpu_custom_call.1} parent=1 // pred_check_branch
      %26 = sbr.rel (0) target = $region9
    $region8: #{tpu_custom_call.1} parent=1 // pred_region
      %28 = vsyncadd [#allocation6], 0
      %s29 = sshll.u32 %s1, 4
      %s30 = int_to_ptr.hbm [resolvable:$true] %s29
      %s31 = sshll.u32 [#allocation5], 4
      %s32 = int_to_ptr.vmem [resolvable:$true] %s31
      %37 = dma.hbm_to_vmem [thread:$0]  %s30, 3328, %s32, [#allocation6], 256, 256, 16
    $region9: #{tpu_custom_call.1} parent=1 // pred_fallthru
      _
    // Predicated region
    $region10: #{tpu_custom_call.1} parent=1 // pred_check
      _
    $region11: #{tpu_custom_call.1} parent=1 // pred_check_branch
      %39 = sbr.rel (0) target = $region13
    $region12: #{tpu_custom_call.1} parent=1 // pred_region
      %41 = vsyncadd [#allocation6], 0
      %s43 = sshll.u32 %s2, 4
      %s44 = int_to_ptr.hbm [resolvable:$true] %s43
      %s45 = sshll.u32 [#allocation7], 4
      %s46 = int_to_ptr.vmem [resolvable:$true] %s45
      %48 = dma.hbm_to_vmem [thread:$0]  %s44, 64, %s46, [#allocation6]
    $region13: #{tpu_custom_call.1} parent=1 // pred_fallthru
      _
    // Predicated region
    $region14: #{tpu_custom_call.1} parent=1 // pred_check
      _
    $region15: #{tpu_custom_call.1} parent=1 // pred_check_branch
      %50 = sbr.rel (0) target = $region17
    $region16: #{tpu_custom_call.1} parent=1 // pred_region
      %52 = vsyncadd [#allocation9], 0
      %s53 = sshll.u32 %s3, 4
      %s54 = int_to_ptr.hbm [resolvable:$true] %s53
      %s55 = sshll.u32 [#allocation8], 4
      %s56 = int_to_ptr.vmem [resolvable:$true] %s55
      %61 = dma.hbm_to_vmem [thread:$0]  %s54, 40960, %s56, [#allocation9], 640, 640, 40
    $region17: #{tpu_custom_call.1} parent=1 // pred_fallthru
      _
    // Predicated region
    $region18: #{tpu_custom_call.1} parent=1 // pred_check
      _
    $region19: #{tpu_custom_call.1} parent=1 // pred_check_branch
      %63 = sbr.rel (0) target = $region21
    $region20: #{tpu_custom_call.1} parent=1 // pred_region
      %65 = vsyncadd [#allocation9], 0
      %s67 = sshll.u32 %s4, 4
      %s68 = int_to_ptr.hbm [resolvable:$true] %s67
      %s69 = sshll.u32 [#allocation10], 4
      %s70 = int_to_ptr.vmem [resolvable:$true] %s69
      %72 = dma.hbm_to_vmem [thread:$0]  %s68, 160, %s70, [#allocation9]
    $region21: #{tpu_custom_call.1} parent=1 // pred_fallthru
      _
    // Predicated region
    $region22: #{tpu_custom_call.1} parent=1 // pred_check
      _
    $region23: #{tpu_custom_call.1} parent=1 // pred_check_branch
      %74 = sbr.rel (0) target = $region25
    $region24: #{tpu_custom_call.1} parent=1 // pred_region
      %76 = dma.done [#allocation3], 128
    $region25: #{tpu_custom_call.1} parent=1 // pred_fallthru
      _
    // Predicated region
    $region26: #{tpu_custom_call.1} parent=1 // pred_check
      _
    $region27: #{tpu_custom_call.1} parent=1 // pred_check_branch
      %78 = sbr.rel (0) target = $region29
    $region28: #{tpu_custom_call.1} parent=1 // pred_region
      %80 = dma.done [#allocation6], 3328
    $region29: #{tpu_custom_call.1} parent=1 // pred_fallthru
      _
    // Predicated region
    $region30: #{tpu_custom_call.1} parent=1 // pred_check
      _
    $region31: #{tpu_custom_call.1} parent=1 // pred_check_branch
      %82 = sbr.rel (0) target = $region33
    $region32: #{tpu_custom_call.1} parent=1 // pred_region
      %84 = dma.done [#allocation6], 64
    $region33: #{tpu_custom_call.1} parent=1 // pred_fallthru
      _
    // Predicated region
    $region34: #{tpu_custom_call.1} parent=1 // pred_check
      _
    $region35: #{tpu_custom_call.1} parent=1 // pred_check_branch
      %86 = sbr.rel (0) target = $region37
    $region36: #{tpu_custom_call.1} parent=1 // pred_region
      %88 = dma.done [#allocation9], 40960
    $region37: #{tpu_custom_call.1} parent=1 // pred_fallthru
      _
    // Predicated region
    $region38: #{tpu_custom_call.1} parent=1 // pred_check
      _
    $region39: #{tpu_custom_call.1} parent=1 // pred_check_branch
      %90 = sbr.rel (0) target = $region41
    $region40: #{tpu_custom_call.1} parent=1 // pred_region
      %92 = dma.done [#allocation9], 160
    $region41: #{tpu_custom_call.1} parent=1 // pred_fallthru
      _
    %v94 = vld [vmem:[#allocation2] sm:$0xff]
    %v95 = vpack.c.bf16 %v94, %v94
    %v96 = vld [vmem:[#allocation5] sm:$0xff]
    %v97 = vld [vmem:[#allocation5 + $0x8] sm:$0xff]
    %v98 = vld [vmem:[#allocation5 + $0x10] sm:$0xff]
    %v99 = vld [vmem:[#allocation5 + $0x18] sm:$0xff]
    %v100 = vld [vmem:[#allocation5 + $0x20] sm:$0xff]
    %v101 = vld [vmem:[#allocation5 + $0x28] sm:$0xff]
    %v102 = vld [vmem:[#allocation5 + $0x30] sm:$0xff]
    %v103 = vld [vmem:[#allocation5 + $0x38] sm:$0xff]
    %v104 = vld [vmem:[#allocation5 + $0x40] sm:$0xff]
    %v105 = vld [vmem:[#allocation5 + $0x48] sm:$0xff]
    %v106 = vld [vmem:[#allocation5 + $0x50] sm:$0xff]
    %v107 = vld [vmem:[#allocation5 + $0x58] sm:$0xff]
    %v108 = vld [vmem:[#allocation5 + $0x60] sm:$0xff]
    %v109 = vld [vmem:[#allocation5 + $0x68] sm:$0xff]
    %v110 = vld [vmem:[#allocation5 + $0x70] sm:$0xff]
    %v111 = vld [vmem:[#allocation5 + $0x78] sm:$0xff]
    %v112 = vld [vmem:[#allocation5 + $0x80] sm:$0xff]
    %v113 = vld [vmem:[#allocation5 + $0x88] sm:$0xff]
    %v114 = vld [vmem:[#allocation5 + $0x90] sm:$0xff]
    %v115 = vld [vmem:[#allocation5 + $0x98] sm:$0xff]
    %v116 = vld [vmem:[#allocation5 + $0xa0] sm:$0xff]
    %v117 = vld [vmem:[#allocation5 + $0xa8] sm:$0xff]
    %v118 = vld [vmem:[#allocation5 + $0xb0] sm:$0xff]
    %v119 = vld [vmem:[#allocation5 + $0xb8] sm:$0xff]
    %v120 = vld [vmem:[#allocation5 + $0xc0] sm:$0x33]
    %v121 = vld [vmem:[#allocation5 + $0xc8] sm:$0x33]
    %v122 = vld [vmem:[#allocation7] sm:$0xf]
    %v124 = vperm.slane %v122, 0
    %v125 = vperm.slane %v122, 1
    %v126 = vperm.slane %v122, 2
    %v127 = vperm.slane %v122, 3
    %v158 = vunpack.c.l.b16 %v96
    %v159 = vunpack.c.h.b16 %v96
    %v160 = vunpack.c.l.b16 %v97
    %v161 = vunpack.c.h.b16 %v97
    %v162 = vunpack.c.l.b16 %v98
    %v163 = vunpack.c.h.b16 %v98
    %v164 = vunpack.c.l.b16 %v99
    %v165 = vunpack.c.h.b16 %v99
    %v166 = vunpack.c.l.b16 %v100
    %v167 = vunpack.c.h.b16 %v100
    %v168 = vunpack.c.l.b16 %v101
    %v169 = vunpack.c.h.b16 %v101
    %v170 = vunpack.c.l.b16 %v102
    %v171 = vunpack.c.h.b16 %v102
    %v172 = vunpack.c.l.b16 %v103
    %v173 = vunpack.c.h.b16 %v103
    %v174 = vunpack.c.l.b16 %v104
    %v175 = vunpack.c.h.b16 %v104
    %v176 = vunpack.c.l.b16 %v105
    %v177 = vunpack.c.h.b16 %v105
    %v178 = vunpack.c.l.b16 %v106
    %v179 = vunpack.c.h.b16 %v106
    %v180 = vunpack.c.l.b16 %v107
    %v181 = vunpack.c.h.b16 %v107
    %v182 = vunpack.c.l.b16 %v108
    %v183 = vunpack.c.h.b16 %v108
    %v184 = vunpack.c.l.b16 %v109
    %v185 = vunpack.c.h.b16 %v109
    %v186 = vunpack.c.l.b16 %v110
    %v187 = vunpack.c.h.b16 %v110
    %v188 = vunpack.c.l.b16 %v111
    %v189 = vunpack.c.h.b16 %v111
    %v190 = vunpack.c.l.b16 %v112
    %v191 = vunpack.c.h.b16 %v112
    %v192 = vunpack.c.l.b16 %v113
    %v193 = vunpack.c.h.b16 %v113
    %v194 = vunpack.c.l.b16 %v114
    %v195 = vunpack.c.h.b16 %v114
    %v196 = vunpack.c.l.b16 %v115
    %v197 = vunpack.c.h.b16 %v115
    %v198 = vunpack.c.l.b16 %v116
    %v199 = vunpack.c.h.b16 %v116
    %v200 = vunpack.c.l.b16 %v117
    %v201 = vunpack.c.h.b16 %v117
    %v202 = vunpack.c.l.b16 %v118
    %v203 = vunpack.c.h.b16 %v118
    %v204 = vunpack.c.l.b16 %v119
    %v205 = vunpack.c.h.b16 %v119
    %v206 = vunpack.c.l.b16 %v120
    %v207 = vunpack.c.h.b16 %v120
    %v208 = vunpack.c.l.b16 %v121
    %v209 = vunpack.c.h.b16 %v121
    %v210 = vpack.c.b16 %v162, %v158
    %v211 = vpack.c.b16 %v163, %v159
    %v212 = vpack.c.b16 %v164, %v160
    %v213 = vpack.c.b16 %v165, %v161
    %v214 = vpack.c.b16 %v170, %v166
    %v215 = vpack.c.b16 %v171, %v167
    %v216 = vpack.c.b16 %v172, %v168
    %v217 = vpack.c.b16 %v173, %v169
    %v218 = vpack.c.b16 %v178, %v174
    %v219 = vpack.c.b16 %v179, %v175
    %v220 = vpack.c.b16 %v180, %v176
    %v221 = vpack.c.b16 %v181, %v177
    %v222 = vpack.c.b16 %v186, %v182
    %v223 = vpack.c.b16 %v187, %v183
    %v224 = vpack.c.b16 %v188, %v184
    %v225 = vpack.c.b16 %v189, %v185
    %v226 = vpack.c.b16 %v194, %v190
    %v227 = vpack.c.b16 %v195, %v191
    %v228 = vpack.c.b16 %v196, %v192
    %v229 = vpack.c.b16 %v197, %v193
    %v230 = vpack.c.b16 %v202, %v198
    %v231 = vpack.c.b16 %v203, %v199
    %v232 = vpack.c.b16 %v204, %v200
    %v233 = vpack.c.b16 %v205, %v201
    %v234 = vpack.c.b16 %v206, %v206
    %v235 = vpack.c.b16 %v207, %v207
    %v236 = vpack.c.b16 %v208, %v208
    %v237 = vpack.c.b16 %v209, %v209
    %vm262 = vcmask 818176
    %v264 = vsel %vm262, %v95, 0
    %vm266 = vcmask 1041408
    %v268 = vsel %vm266, %v234, 0
    %v271 = vsel %vm266, %v235, 0
    %v274 = vsel %vm266, %v236, 0
    %v277 = vsel %vm266, %v237, 0
    %279 = vmatpush.bf16.msra.mxu0 0
    %280 = vmatpush.bf16.msra.mxu0 %v268
    %281 = vmatpush.bf16.msra.mxu0 %v230
    %282 = vmatpush.bf16.msra.mxu0 %v226
    %283 = vmatpush.bf16.msra.mxu0 %v222
    %284 = vmatpush.bf16.msra.mxu0 %v218
    %285 = vmatpush.bf16.msra.mxu0 %v214
    %286 = vmatpush.bf16.msra.mxu0 %v210
    %287 = vmatmul.bf16.gmra.mxu0 %v264
    %v288 = vpop.f32.mrf.mxu0
    %v289 = vadd.f32 %v124, %v288
    %v290 = vpop.f32.mrf.mxu0
    %291 = vdwg.mxu0
    %292 = vmatpush.bf16.msra.mxu0 0
    %293 = vmatpush.bf16.msra.mxu0 %v271
    %294 = vmatpush.bf16.msra.mxu0 %v231
    %295 = vmatpush.bf16.msra.mxu0 %v227
    %296 = vmatpush.bf16.msra.mxu0 %v223
    %297 = vmatpush.bf16.msra.mxu0 %v219
    %298 = vmatpush.bf16.msra.mxu0 %v215
    %299 = vmatpush.bf16.msra.mxu0 %v211
    %300 = vmatmul.bf16.gmra.mxu0 %v264
    %v301 = vpop.f32.mrf.mxu0
    %v302 = vadd.f32 %v125, %v301
    %v303 = vpop.f32.mrf.mxu0
    %304 = vdwg.mxu0
    %305 = vmatpush.bf16.msra.mxu0 0
    %306 = vmatpush.bf16.msra.mxu0 %v274
    %307 = vmatpush.bf16.msra.mxu0 %v232
    %308 = vmatpush.bf16.msra.mxu0 %v228
    %309 = vmatpush.bf16.msra.mxu0 %v224
    %310 = vmatpush.bf16.msra.mxu0 %v220
    %311 = vmatpush.bf16.msra.mxu0 %v216
    %312 = vmatpush.bf16.msra.mxu0 %v212
    %313 = vmatmul.bf16.gmra.mxu0 %v264
    %v314 = vpop.f32.mrf.mxu0
    %v315 = vadd.f32 %v126, %v314
    %v316 = vpop.f32.mrf.mxu0
    %317 = vdwg.mxu0
    %318 = vmatpush.bf16.msra.mxu0 0
    %319 = vmatpush.bf16.msra.mxu0 %v277
    %320 = vmatpush.bf16.msra.mxu0 %v233
    %321 = vmatpush.bf16.msra.mxu0 %v229
    %322 = vmatpush.bf16.msra.mxu0 %v225
    %323 = vmatpush.bf16.msra.mxu0 %v221
    %324 = vmatpush.bf16.msra.mxu0 %v217
    %325 = vmatpush.bf16.msra.mxu0 %v213
    %326 = vmatmul.bf16.gmra.mxu0 %v264
    %v327 = vpop.f32.mrf.mxu0
    %v328 = vadd.f32 %v127, %v327
    %v329 = vpop.f32.mrf.mxu0
    %330 = vdwg.mxu0
    %v331 = vmax.f32 %v289, 0.0
    %v332 = vmax.f32 %v302, 0.0
    %v333 = vmax.f32 %v315, 0.0
    %v334 = vmax.f32 %v328, 0.0
    %v335 = vpack.c.bf16 %v331, %v331
    %v336 = vpack.c.bf16 %v332, %v332
    %v337 = vpack.c.bf16 %v333, %v333
    %v338 = vpack.c.bf16 %v334, %v334
    %v339 = vld [vmem:[#allocation8] sm:$0xff]
    %v340 = vld [vmem:[#allocation8 + $0x8] sm:$0xff]
    %v341 = vld [vmem:[#allocation8 + $0x10] sm:$0xff]
    %v342 = vld [vmem:[#allocation8 + $0x18] sm:$0xff]
    %v343 = vld [vmem:[#allocation8 + $0x20] sm:$0xff]
    %v344 = vld [vmem:[#allocation8 + $0x28] sm:$0xff]
    %v345 = vld [vmem:[#allocation8 + $0x30] sm:$0xff]
    %v346 = vld [vmem:[#allocation8 + $0x38] sm:$0xff]
    %v347 = vld [vmem:[#allocation8 + $0x40] sm:$0xff]
    %v348 = vld [vmem:[#allocation8 + $0x48] sm:$0xff]
    %v349 = vld [vmem:[#allocation8 + $0x50] sm:$0xff]
    %v350 = vld [vmem:[#allocation8 + $0x58] sm:$0xff]
    %v351 = vld [vmem:[#allocation8 + $0x60] sm:$0xff]
    %v352 = vld [vmem:[#allocation8 + $0x68] sm:$0xff]
    %v353 = vld [vmem:[#allocation8 + $0x70] sm:$0xff]
    %v354 = vld [vmem:[#allocation8 + $0x78] sm:$0xff]
    %v355 = vld [vmem:[#allocation8 + $0x80] sm:$0xff]
    %v356 = vld [vmem:[#allocation8 + $0x88] sm:$0xff]
    %v357 = vld [vmem:[#allocation8 + $0x90] sm:$0xff]
    %v358 = vld [vmem:[#allocation8 + $0x98] sm:$0xff]
    %v359 = vld [vmem:[#allocation8 + $0xa0] sm:$0xff]
    %v360 = vld [vmem:[#allocation8 + $0xa8] sm:$0xff]
    %v361 = vld [vmem:[#allocation8 + $0xb0] sm:$0xff]
    %v362 = vld [vmem:[#allocation8 + $0xb8] sm:$0xff]
    %v363 = vld [vmem:[#allocation8 + $0xc0] sm:$0xff]
    %v364 = vld [vmem:[#allocation8 + $0xc8] sm:$0xff]
    %v365 = vld [vmem:[#allocation8 + $0xd0] sm:$0xff]
    %v366 = vld [vmem:[#allocation8 + $0xd8] sm:$0xff]
    %v367 = vld [vmem:[#allocation8 + $0xe0] sm:$0xff]
    %v368 = vld [vmem:[#allocation8 + $0xe8] sm:$0xff]
    %v369 = vld [vmem:[#allocation8 + $0xf0] sm:$0xff]
    %v370 = vld [vmem:[#allocation8 + $0xf8] sm:$0xff]
    %v371 = vld [vmem:[#allocation8 + $0x100] sm:$0xff]
    %v372 = vld [vmem:[#allocation8 + $0x108] sm:$0xff]
    %v373 = vld [vmem:[#allocation8 + $0x110] sm:$0xff]
    %v374 = vld [vmem:[#allocation8 + $0x118] sm:$0xff]
    %v375 = vld [vmem:[#allocation8 + $0x120] sm:$0xff]
    %v376 = vld [vmem:[#allocation8 + $0x128] sm:$0xff]
    %v377 = vld [vmem:[#allocation8 + $0x130] sm:$0xff]
    %v378 = vld [vmem:[#allocation8 + $0x138] sm:$0xff]
    %v379 = vld [vmem:[#allocation8 + $0x140] sm:$0xff]
    %v380 = vld [vmem:[#allocation8 + $0x148] sm:$0xff]
    %v381 = vld [vmem:[#allocation8 + $0x150] sm:$0xff]
    %v382 = vld [vmem:[#allocation8 + $0x158] sm:$0xff]
    %v383 = vld [vmem:[#allocation8 + $0x160] sm:$0xff]
    %v384 = vld [vmem:[#allocation8 + $0x168] sm:$0xff]
    %v385 = vld [vmem:[#allocation8 + $0x170] sm:$0xff]
    %v386 = vld [vmem:[#allocation8 + $0x178] sm:$0xff]
    %v387 = vld [vmem:[#allocation8 + $0x180] sm:$0xff]
    %v388 = vld [vmem:[#allocation8 + $0x188] sm:$0xff]
    %v389 = vld [vmem:[#allocation8 + $0x190] sm:$0xff]
    %v390 = vld [vmem:[#allocation8 + $0x198] sm:$0xff]
    %v391 = vld [vmem:[#allocation8 + $0x1a0] sm:$0xff]
    %v392 = vld [vmem:[#allocation8 + $0x1a8] sm:$0xff]
    %v393 = vld [vmem:[#allocation8 + $0x1b0] sm:$0xff]
    %v394 = vld [vmem:[#allocation8 + $0x1b8] sm:$0xff]
    %v395 = vld [vmem:[#allocation8 + $0x1c0] sm:$0xff]
    %v396 = vld [vmem:[#allocation8 + $0x1c8] sm:$0xff]
    %v397 = vld [vmem:[#allocation8 + $0x1d0] sm:$0xff]
    %v398 = vld [vmem:[#allocation8 + $0x1d8] sm:$0xff]
    %v399 = vld [vmem:[#allocation8 + $0x1e0] sm:$0xff]
    %v400 = vld [vmem:[#allocation8 + $0x1e8] sm:$0xff]
    %v401 = vld [vmem:[#allocation8 + $0x1f0] sm:$0xff]
    %v402 = vld [vmem:[#allocation8 + $0x1f8] sm:$0xff]
    %v403 = vld [vmem:[#allocation8 + $0x200] sm:$0xff]
    %v404 = vld [vmem:[#allocation8 + $0x208] sm:$0xff]
    %v405 = vld [vmem:[#allocation8 + $0x210] sm:$0xff]
    %v406 = vld [vmem:[#allocation8 + $0x218] sm:$0xff]
    %v407 = vld [vmem:[#allocation8 + $0x220] sm:$0xff]
    %v408 = vld [vmem:[#allocation8 + $0x228] sm:$0xff]
    %v409 = vld [vmem:[#allocation8 + $0x230] sm:$0xff]
    %v410 = vld [vmem:[#allocation8 + $0x238] sm:$0xff]
    %v411 = vld [vmem:[#allocation8 + $0x240] sm:$0xff]
    %v412 = vld [vmem:[#allocation8 + $0x248] sm:$0xff]
    %v413 = vld [vmem:[#allocation8 + $0x250] sm:$0xff]
    %v414 = vld [vmem:[#allocation8 + $0x258] sm:$0xff]
    %v415 = vld [vmem:[#allocation8 + $0x260] sm:$0xff]
    %v416 = vld [vmem:[#allocation8 + $0x268] sm:$0xff]
    %v417 = vld [vmem:[#allocation8 + $0x270] sm:$0xff]
    %v418 = vld [vmem:[#allocation8 + $0x278] sm:$0xff]
    %v419 = vld [vmem:[#allocation8 + $0x280] sm:$0xff]
    %v420 = vld [vmem:[#allocation8 + $0x288] sm:$0xff]
    %v421 = vld [vmem:[#allocation8 + $0x290] sm:$0xff]
    %v422 = vld [vmem:[#allocation8 + $0x298] sm:$0xff]
    %v423 = vld [vmem:[#allocation8 + $0x2a0] sm:$0xff]
    %v424 = vld [vmem:[#allocation8 + $0x2a8] sm:$0xff]
    %v425 = vld [vmem:[#allocation8 + $0x2b0] sm:$0xff]
    %v426 = vld [vmem:[#allocation8 + $0x2b8] sm:$0xff]
    %v427 = vld [vmem:[#allocation8 + $0x2c0] sm:$0xff]
    %v428 = vld [vmem:[#allocation8 + $0x2c8] sm:$0xff]
    %v429 = vld [vmem:[#allocation8 + $0x2d0] sm:$0xff]
    %v430 = vld [vmem:[#allocation8 + $0x2d8] sm:$0xff]
    %v431 = vld [vmem:[#allocation8 + $0x2e0] sm:$0xff]
    %v432 = vld [vmem:[#allocation8 + $0x2e8] sm:$0xff]
    %v433 = vld [vmem:[#allocation8 + $0x2f0] sm:$0xff]
    %v434 = vld [vmem:[#allocation8 + $0x2f8] sm:$0xff]
    %v435 = vld [vmem:[#allocation8 + $0x300] sm:$0xff]
    %v436 = vld [vmem:[#allocation8 + $0x308] sm:$0xff]
    %v437 = vld [vmem:[#allocation8 + $0x310] sm:$0xff]
    %v438 = vld [vmem:[#allocation8 + $0x318] sm:$0xff]
    %v439 = vld [vmem:[#allocation8 + $0x320] sm:$0xff]
    %v440 = vld [vmem:[#allocation8 + $0x328] sm:$0xff]
    %v441 = vld [vmem:[#allocation8 + $0x330] sm:$0xff]
    %v442 = vld [vmem:[#allocation8 + $0x338] sm:$0xff]
    %v443 = vld [vmem:[#allocation8 + $0x340] sm:$0xff]
    %v444 = vld [vmem:[#allocation8 + $0x348] sm:$0xff]
    %v445 = vld [vmem:[#allocation8 + $0x350] sm:$0xff]
    %v446 = vld [vmem:[#allocation8 + $0x358] sm:$0xff]
    %v447 = vld [vmem:[#allocation8 + $0x360] sm:$0xff]
    %v448 = vld [vmem:[#allocation8 + $0x368] sm:$0xff]
    %v449 = vld [vmem:[#allocation8 + $0x370] sm:$0xff]
    %v450 = vld [vmem:[#allocation8 + $0x378] sm:$0xff]
    %v451 = vld [vmem:[#allocation8 + $0x380] sm:$0xff]
    %v452 = vld [vmem:[#allocation8 + $0x388] sm:$0xff]
    %v453 = vld [vmem:[#allocation8 + $0x390] sm:$0xff]
    %v454 = vld [vmem:[#allocation8 + $0x398] sm:$0xff]
    %v455 = vld [vmem:[#allocation8 + $0x3a0] sm:$0xff]
    %v456 = vld [vmem:[#allocation8 + $0x3a8] sm:$0xff]
    %v457 = vld [vmem:[#allocation8 + $0x3b0] sm:$0xff]
    %v458 = vld [vmem:[#allocation8 + $0x3b8] sm:$0xff]
    %v459 = vld [vmem:[#allocation8 + $0x3c0] sm:$0xff]
    %v460 = vld [vmem:[#allocation8 + $0x3c8] sm:$0xff]
    %v461 = vld [vmem:[#allocation8 + $0x3d0] sm:$0xff]
    %v462 = vld [vmem:[#allocation8 + $0x3d8] sm:$0xff]
    %v463 = vld [vmem:[#allocation8 + $0x3e0] sm:$0xff]
    %v464 = vld [vmem:[#allocation8 + $0x3e8] sm:$0xff]
    %v465 = vld [vmem:[#allocation8 + $0x3f0] sm:$0xff]
    %v466 = vld [vmem:[#allocation8 + $0x3f8] sm:$0xff]
    %v467 = vld [vmem:[#allocation8 + $0x400] sm:$0xff]
    %v468 = vld [vmem:[#allocation8 + $0x408] sm:$0xff]
    %v469 = vld [vmem:[#allocation8 + $0x410] sm:$0xff]
    %v470 = vld [vmem:[#allocation8 + $0x418] sm:$0xff]
    %v471 = vld [vmem:[#allocation8 + $0x420] sm:$0xff]
    %v472 = vld [vmem:[#allocation8 + $0x428] sm:$0xff]
    %v473 = vld [vmem:[#allocation8 + $0x430] sm:$0xff]
    %v474 = vld [vmem:[#allocation8 + $0x438] sm:$0xff]
    %v475 = vld [vmem:[#allocation8 + $0x440] sm:$0xff]
    %v476 = vld [vmem:[#allocation8 + $0x448] sm:$0xff]
    %v477 = vld [vmem:[#allocation8 + $0x450] sm:$0xff]
    %v478 = vld [vmem:[#allocation8 + $0x458] sm:$0xff]
    %v479 = vld [vmem:[#allocation8 + $0x460] sm:$0xff]
    %v480 = vld [vmem:[#allocation8 + $0x468] sm:$0xff]
    %v481 = vld [vmem:[#allocation8 + $0x470] sm:$0xff]
    %v482 = vld [vmem:[#allocation8 + $0x478] sm:$0xff]
    %v483 = vld [vmem:[#allocation8 + $0x480] sm:$0xff]
    %v484 = vld [vmem:[#allocation8 + $0x488] sm:$0xff]
    %v485 = vld [vmem:[#allocation8 + $0x490] sm:$0xff]
    %v486 = vld [vmem:[#allocation8 + $0x498] sm:$0xff]
    %v487 = vld [vmem:[#allocation8 + $0x4a0] sm:$0xff]
    %v488 = vld [vmem:[#allocation8 + $0x4a8] sm:$0xff]
    %v489 = vld [vmem:[#allocation8 + $0x4b0] sm:$0xff]
    %v490 = vld [vmem:[#allocation8 + $0x4b8] sm:$0xff]
    %v491 = vld [vmem:[#allocation8 + $0x4c0] sm:$0xff]
    %v492 = vld [vmem:[#allocation8 + $0x4c8] sm:$0xff]
    %v493 = vld [vmem:[#allocation8 + $0x4d0] sm:$0xff]
    %v494 = vld [vmem:[#allocation8 + $0x4d8] sm:$0xff]
    %v495 = vld [vmem:[#allocation8 + $0x4e0] sm:$0xff]
    %v496 = vld [vmem:[#allocation8 + $0x4e8] sm:$0xff]
    %v497 = vld [vmem:[#allocation8 + $0x4f0] sm:$0xff]
    %v498 = vld [vmem:[#allocation8 + $0x4f8] sm:$0xff]
    %v499 = vld [vmem:[#allocation8 + $0x500] sm:$0xff]
    %v500 = vld [vmem:[#allocation8 + $0x508] sm:$0xff]
    %v501 = vld [vmem:[#allocation8 + $0x510] sm:$0xff]
    %v502 = vld [vmem:[#allocation8 + $0x518] sm:$0xff]
    %v503 = vld [vmem:[#allocation8 + $0x520] sm:$0xff]
    %v504 = vld [vmem:[#allocation8 + $0x528] sm:$0xff]
    %v505 = vld [vmem:[#allocation8 + $0x530] sm:$0xff]
    %v506 = vld [vmem:[#allocation8 + $0x538] sm:$0xff]
    %v507 = vld [vmem:[#allocation8 + $0x540] sm:$0xff]
    %v508 = vld [vmem:[#allocation8 + $0x548] sm:$0xff]
    %v509 = vld [vmem:[#allocation8 + $0x550] sm:$0xff]
    %v510 = vld [vmem:[#allocation8 + $0x558] sm:$0xff]
    %v511 = vld [vmem:[#allocation8 + $0x560] sm:$0xff]
    %v512 = vld [vmem:[#allocation8 + $0x568] sm:$0xff]
    %v513 = vld [vmem:[#allocation8 + $0x570] sm:$0xff]
    %v514 = vld [vmem:[#allocation8 + $0x578] sm:$0xff]
    %v515 = vld [vmem:[#allocation8 + $0x580] sm:$0xff]
    %v516 = vld [vmem:[#allocation8 + $0x588] sm:$0xff]
    %v517 = vld [vmem:[#allocation8 + $0x590] sm:$0xff]
    %v518 = vld [vmem:[#allocation8 + $0x598] sm:$0xff]
    %v519 = vld [vmem:[#allocation8 + $0x5a0] sm:$0xff]
    %v520 = vld [vmem:[#allocation8 + $0x5a8] sm:$0xff]
    %v521 = vld [vmem:[#allocation8 + $0x5b0] sm:$0xff]
    %v522 = vld [vmem:[#allocation8 + $0x5b8] sm:$0xff]
    %v523 = vld [vmem:[#allocation8 + $0x5c0] sm:$0xff]
    %v524 = vld [vmem:[#allocation8 + $0x5c8] sm:$0xff]
    %v525 = vld [vmem:[#allocation8 + $0x5d0] sm:$0xff]
    %v526 = vld [vmem:[#allocation8 + $0x5d8] sm:$0xff]
    %v527 = vld [vmem:[#allocation8 + $0x5e0] sm:$0xff]
    %v528 = vld [vmem:[#allocation8 + $0x5e8] sm:$0xff]
    %v529 = vld [vmem:[#allocation8 + $0x5f0] sm:$0xff]
    %v530 = vld [vmem:[#allocation8 + $0x5f8] sm:$0xff]
    %v531 = vld [vmem:[#allocation8 + $0x600] sm:$0xff]
    %v532 = vld [vmem:[#allocation8 + $0x608] sm:$0xff]
    %v533 = vld [vmem:[#allocation8 + $0x610] sm:$0xff]
    %v534 = vld [vmem:[#allocation8 + $0x618] sm:$0xff]
    %v535 = vld [vmem:[#allocation8 + $0x620] sm:$0xff]
    %v536 = vld [vmem:[#allocation8 + $0x628] sm:$0xff]
    %v537 = vld [vmem:[#allocation8 + $0x630] sm:$0xff]
    %v538 = vld [vmem:[#allocation8 + $0x638] sm:$0xff]
    %v539 = vld [vmem:[#allocation8 + $0x640] sm:$0xff]
    %v540 = vld [vmem:[#allocation8 + $0x648] sm:$0xff]
    %v541 = vld [vmem:[#allocation8 + $0x650] sm:$0xff]
    %v542 = vld [vmem:[#allocation8 + $0x658] sm:$0xff]
    %v543 = vld [vmem:[#allocation8 + $0x660] sm:$0xff]
    %v544 = vld [vmem:[#allocation8 + $0x668] sm:$0xff]
    %v545 = vld [vmem:[#allocation8 + $0x670] sm:$0xff]
    %v546 = vld [vmem:[#allocation8 + $0x678] sm:$0xff]
    %v547 = vld [vmem:[#allocation8 + $0x680] sm:$0xff]
    %v548 = vld [vmem:[#allocation8 + $0x688] sm:$0xff]
    %v549 = vld [vmem:[#allocation8 + $0x690] sm:$0xff]
    %v550 = vld [vmem:[#allocation8 + $0x698] sm:$0xff]
    %v551 = vld [vmem:[#allocation8 + $0x6a0] sm:$0xff]
    %v552 = vld [vmem:[#allocation8 + $0x6a8] sm:$0xff]
    %v553 = vld [vmem:[#allocation8 + $0x6b0] sm:$0xff]
    %v554 = vld [vmem:[#allocation8 + $0x6b8] sm:$0xff]
    %v555 = vld [vmem:[#allocation8 + $0x6c0] sm:$0xff]
    %v556 = vld [vmem:[#allocation8 + $0x6c8] sm:$0xff]
    %v557 = vld [vmem:[#allocation8 + $0x6d0] sm:$0xff]
    %v558 = vld [vmem:[#allocation8 + $0x6d8] sm:$0xff]
    %v559 = vld [vmem:[#allocation8 + $0x6e0] sm:$0xff]
    %v560 = vld [vmem:[#allocation8 + $0x6e8] sm:$0xff]
    %v561 = vld [vmem:[#allocation8 + $0x6f0] sm:$0xff]
    %v562 = vld [vmem:[#allocation8 + $0x6f8] sm:$0xff]
    %v563 = vld [vmem:[#allocation8 + $0x700] sm:$0xff]
    %v564 = vld [vmem:[#allocation8 + $0x708] sm:$0xff]
    %v565 = vld [vmem:[#allocation8 + $0x710] sm:$0xff]
    %v566 = vld [vmem:[#allocation8 + $0x718] sm:$0xff]
    %v567 = vld [vmem:[#allocation8 + $0x720] sm:$0xff]
    %v568 = vld [vmem:[#allocation8 + $0x728] sm:$0xff]
    %v569 = vld [vmem:[#allocation8 + $0x730] sm:$0xff]
    %v570 = vld [vmem:[#allocation8 + $0x738] sm:$0xff]
    %v571 = vld [vmem:[#allocation8 + $0x740] sm:$0xff]
    %v572 = vld [vmem:[#allocation8 + $0x748] sm:$0xff]
    %v573 = vld [vmem:[#allocation8 + $0x750] sm:$0xff]
    %v574 = vld [vmem:[#allocation8 + $0x758] sm:$0xff]
    %v575 = vld [vmem:[#allocation8 + $0x760] sm:$0xff]
    %v576 = vld [vmem:[#allocation8 + $0x768] sm:$0xff]
    %v577 = vld [vmem:[#allocation8 + $0x770] sm:$0xff]
    %v578 = vld [vmem:[#allocation8 + $0x778] sm:$0xff]
    %v579 = vld [vmem:[#allocation8 + $0x780] sm:$0xff]
    %v580 = vld [vmem:[#allocation8 + $0x788] sm:$0xff]
    %v581 = vld [vmem:[#allocation8 + $0x790] sm:$0xff]
    %v582 = vld [vmem:[#allocation8 + $0x798] sm:$0xff]
    %v583 = vld [vmem:[#allocation8 + $0x7a0] sm:$0xff]
    %v584 = vld [vmem:[#allocation8 + $0x7a8] sm:$0xff]
    %v585 = vld [vmem:[#allocation8 + $0x7b0] sm:$0xff]
    %v586 = vld [vmem:[#allocation8 + $0x7b8] sm:$0xff]
    %v587 = vld [vmem:[#allocation8 + $0x7c0] sm:$0xff]
    %v588 = vld [vmem:[#allocation8 + $0x7c8] sm:$0xff]
    %v589 = vld [vmem:[#allocation8 + $0x7d0] sm:$0xff]
    %v590 = vld [vmem:[#allocation8 + $0x7d8] sm:$0xff]
    %v591 = vld [vmem:[#allocation8 + $0x7e0] sm:$0xff]
    %v592 = vld [vmem:[#allocation8 + $0x7e8] sm:$0xff]
    %v593 = vld [vmem:[#allocation8 + $0x7f0] sm:$0xff]
    %v594 = vld [vmem:[#allocation8 + $0x7f8] sm:$0xff]
    %v595 = vld [vmem:[#allocation8 + $0x800] sm:$0xff]
    %v596 = vld [vmem:[#allocation8 + $0x808] sm:$0xff]
    %v597 = vld [vmem:[#allocation8 + $0x810] sm:$0xff]
    %v598 = vld [vmem:[#allocation8 + $0x818] sm:$0xff]
    %v599 = vld [vmem:[#allocation8 + $0x820] sm:$0xff]
    %v600 = vld [vmem:[#allocation8 + $0x828] sm:$0xff]
    %v601 = vld [vmem:[#allocation8 + $0x830] sm:$0xff]
    %v602 = vld [vmem:[#allocation8 + $0x838] sm:$0xff]
    %v603 = vld [vmem:[#allocation8 + $0x840] sm:$0xff]
    %v604 = vld [vmem:[#allocation8 + $0x848] sm:$0xff]
    %v605 = vld [vmem:[#allocation8 + $0x850] sm:$0xff]
    %v606 = vld [vmem:[#allocation8 + $0x858] sm:$0xff]
    %v607 = vld [vmem:[#allocation8 + $0x860] sm:$0xff]
    %v608 = vld [vmem:[#allocation8 + $0x868] sm:$0xff]
    %v609 = vld [vmem:[#allocation8 + $0x870] sm:$0xff]
    %v610 = vld [vmem:[#allocation8 + $0x878] sm:$0xff]
    %v611 = vld [vmem:[#allocation8 + $0x880] sm:$0xff]
    %v612 = vld [vmem:[#allocation8 + $0x888] sm:$0xff]
    %v613 = vld [vmem:[#allocation8 + $0x890] sm:$0xff]
    %v614 = vld [vmem:[#allocation8 + $0x898] sm:$0xff]
    %v615 = vld [vmem:[#allocation8 + $0x8a0] sm:$0xff]
    %v616 = vld [vmem:[#allocation8 + $0x8a8] sm:$0xff]
    %v617 = vld [vmem:[#allocation8 + $0x8b0] sm:$0xff]
    %v618 = vld [vmem:[#allocation8 + $0x8b8] sm:$0xff]
    %v619 = vld [vmem:[#allocation8 + $0x8c0] sm:$0xff]
    %v620 = vld [vmem:[#allocation8 + $0x8c8] sm:$0xff]
    %v621 = vld [vmem:[#allocation8 + $0x8d0] sm:$0xff]
    %v622 = vld [vmem:[#allocation8 + $0x8d8] sm:$0xff]
    %v623 = vld [vmem:[#allocation8 + $0x8e0] sm:$0xff]
    %v624 = vld [vmem:[#allocation8 + $0x8e8] sm:$0xff]
    %v625 = vld [vmem:[#allocation8 + $0x8f0] sm:$0xff]
    %v626 = vld [vmem:[#allocation8 + $0x8f8] sm:$0xff]
    %v627 = vld [vmem:[#allocation8 + $0x900] sm:$0xff]
    %v628 = vld [vmem:[#allocation8 + $0x908] sm:$0xff]
    %v629 = vld [vmem:[#allocation8 + $0x910] sm:$0xff]
    %v630 = vld [vmem:[#allocation8 + $0x918] sm:$0xff]
    %v631 = vld [vmem:[#allocation8 + $0x920] sm:$0xff]
    %v632 = vld [vmem:[#allocation8 + $0x928] sm:$0xff]
    %v633 = vld [vmem:[#allocation8 + $0x930] sm:$0xff]
    %v634 = vld [vmem:[#allocation8 + $0x938] sm:$0xff]
    %v635 = vld [vmem:[#allocation8 + $0x940] sm:$0xff]
    %v636 = vld [vmem:[#allocation8 + $0x948] sm:$0xff]
    %v637 = vld [vmem:[#allocation8 + $0x950] sm:$0xff]
    %v638 = vld [vmem:[#allocation8 + $0x958] sm:$0xff]
    %v639 = vld [vmem:[#allocation8 + $0x960] sm:$0xff]
    %v640 = vld [vmem:[#allocation8 + $0x968] sm:$0xff]
    %v641 = vld [vmem:[#allocation8 + $0x970] sm:$0xff]
    %v642 = vld [vmem:[#allocation8 + $0x978] sm:$0xff]
    %v643 = vld [vmem:[#allocation8 + $0x980] sm:$0xff]
    %v644 = vld [vmem:[#allocation8 + $0x988] sm:$0xff]
    %v645 = vld [vmem:[#allocation8 + $0x990] sm:$0xff]
    %v646 = vld [vmem:[#allocation8 + $0x998] sm:$0xff]
    %v647 = vld [vmem:[#allocation8 + $0x9a0] sm:$0xff]
    %v648 = vld [vmem:[#allocation8 + $0x9a8] sm:$0xff]
    %v649 = vld [vmem:[#allocation8 + $0x9b0] sm:$0xff]
    %v650 = vld [vmem:[#allocation8 + $0x9b8] sm:$0xff]
    %v651 = vld [vmem:[#allocation8 + $0x9c0] sm:$0xff]
    %v652 = vld [vmem:[#allocation8 + $0x9c8] sm:$0xff]
    %v653 = vld [vmem:[#allocation8 + $0x9d0] sm:$0xff]
    %v654 = vld [vmem:[#allocation8 + $0x9d8] sm:$0xff]
    %v655 = vld [vmem:[#allocation8 + $0x9e0] sm:$0xff]
    %v656 = vld [vmem:[#allocation8 + $0x9e8] sm:$0xff]
    %v657 = vld [vmem:[#allocation8 + $0x9f0] sm:$0xff]
    %v658 = vld [vmem:[#allocation8 + $0x9f8] sm:$0xff]
    %v659 = vld [vmem:[#allocation10] sm:$0xff]
    %v660 = vld [vmem:[#allocation10 + $0x8] sm:$0x3]
    %v663 = vperm.slane %v659, 0
    %v664 = vperm.slane %v659, 1
    %v665 = vperm.slane %v659, 2
    %v666 = vperm.slane %v659, 3
    %v667 = vperm.slane %v659, 4
    %v668 = vperm.slane %v659, 5
    %v669 = vperm.slane %v659, 6
    %v670 = vperm.slane %v659, 7
    %v671 = vperm.slane %v660, 0
    %v672 = vperm.slane %v660, 1
    %v1003 = vunpack.c.l.b16 %v339
    %v1004 = vunpack.c.h.b16 %v339
    %v1005 = vunpack.c.l.b16 %v340
    %v1006 = vunpack.c.h.b16 %v340
    %v1007 = vunpack.c.l.b16 %v341
    %v1008 = vunpack.c.h.b16 %v341
    %v1009 = vunpack.c.l.b16 %v342
    %v1010 = vunpack.c.h.b16 %v342
    %v1011 = vunpack.c.l.b16 %v343
    %v1012 = vunpack.c.h.b16 %v343
    %v1013 = vunpack.c.l.b16 %v344
    %v1014 = vunpack.c.h.b16 %v344
    %v1015 = vunpack.c.l.b16 %v345
    %v1016 = vunpack.c.h.b16 %v345
    %v1017 = vunpack.c.l.b16 %v346
    %v1018 = vunpack.c.h.b16 %v346
    %v1019 = vunpack.c.l.b16 %v347
    %v1020 = vunpack.c.h.b16 %v347
    %v1021 = vunpack.c.l.b16 %v348
    %v1022 = vunpack.c.h.b16 %v348
    %v1023 = vunpack.c.l.b16 %v349
    %v1024 = vunpack.c.h.b16 %v349
    %v1025 = vunpack.c.l.b16 %v350
    %v1026 = vunpack.c.h.b16 %v350
    %v1027 = vunpack.c.l.b16 %v351
    %v1028 = vunpack.c.h.b16 %v351
    %v1029 = vunpack.c.l.b16 %v352
    %v1030 = vunpack.c.h.b16 %v352
    %v1031 = vunpack.c.l.b16 %v353
    %v1032 = vunpack.c.h.b16 %v353
    %v1033 = vunpack.c.l.b16 %v354
    %v1034 = vunpack.c.h.b16 %v354
    %v1035 = vunpack.c.l.b16 %v355
    %v1036 = vunpack.c.h.b16 %v355
    %v1037 = vunpack.c.l.b16 %v356
    %v1038 = vunpack.c.h.b16 %v356
    %v1039 = vunpack.c.l.b16 %v357
    %v1040 = vunpack.c.h.b16 %v357
    %v1041 = vunpack.c.l.b16 %v358
    %v1042 = vunpack.c.h.b16 %v358
    %v1043 = vunpack.c.l.b16 %v359
    %v1044 = vunpack.c.h.b16 %v359
    %v1045 = vunpack.c.l.b16 %v360
    %v1046 = vunpack.c.h.b16 %v360
    %v1047 = vunpack.c.l.b16 %v361
    %v1048 = vunpack.c.h.b16 %v361
    %v1049 = vunpack.c.l.b16 %v362
    %v1050 = vunpack.c.h.b16 %v362
    %v1051 = vunpack.c.l.b16 %v363
    %v1052 = vunpack.c.h.b16 %v363
    %v1053 = vunpack.c.l.b16 %v364
    %v1054 = vunpack.c.h.b16 %v364
    %v1055 = vunpack.c.l.b16 %v365
    %v1056 = vunpack.c.h.b16 %v365
    %v1057 = vunpack.c.l.b16 %v366
    %v1058 = vunpack.c.h.b16 %v366
    %v1059 = vunpack.c.l.b16 %v367
    %v1060 = vunpack.c.h.b16 %v367
    %v1061 = vunpack.c.l.b16 %v368
    %v1062 = vunpack.c.h.b16 %v368
    %v1063 = vunpack.c.l.b16 %v369
    %v1064 = vunpack.c.h.b16 %v369
    %v1065 = vunpack.c.l.b16 %v370
    %v1066 = vunpack.c.h.b16 %v370
    %v1067 = vunpack.c.l.b16 %v371
    %v1068 = vunpack.c.h.b16 %v371
    %v1069 = vunpack.c.l.b16 %v372
    %v1070 = vunpack.c.h.b16 %v372
    %v1071 = vunpack.c.l.b16 %v373
    %v1072 = vunpack.c.h.b16 %v373
    %v1073 = vunpack.c.l.b16 %v374
    %v1074 = vunpack.c.h.b16 %v374
    %v1075 = vunpack.c.l.b16 %v375
    %v1076 = vunpack.c.h.b16 %v375
    %v1077 = vunpack.c.l.b16 %v376
    %v1078 = vunpack.c.h.b16 %v376
    %v1079 = vunpack.c.l.b16 %v377
    %v1080 = vunpack.c.h.b16 %v377
    %v1081 = vunpack.c.l.b16 %v378
    %v1082 = vunpack.c.h.b16 %v378
    %v1083 = vunpack.c.l.b16 %v379
    %v1084 = vunpack.c.h.b16 %v379
    %v1085 = vunpack.c.l.b16 %v380
    %v1086 = vunpack.c.h.b16 %v380
    %v1087 = vunpack.c.l.b16 %v381
    %v1088 = vunpack.c.h.b16 %v381
    %v1089 = vunpack.c.l.b16 %v382
    %v1090 = vunpack.c.h.b16 %v382
    %v1091 = vunpack.c.l.b16 %v383
    %v1092 = vunpack.c.h.b16 %v383
    %v1093 = vunpack.c.l.b16 %v384
    %v1094 = vunpack.c.h.b16 %v384
    %v1095 = vunpack.c.l.b16 %v385
    %v1096 = vunpack.c.h.b16 %v385
    %v1097 = vunpack.c.l.b16 %v386
    %v1098 = vunpack.c.h.b16 %v386
    %v1099 = vunpack.c.l.b16 %v387
    %v1100 = vunpack.c.h.b16 %v387
    %v1101 = vunpack.c.l.b16 %v388
    %v1102 = vunpack.c.h.b16 %v388
    %v1103 = vunpack.c.l.b16 %v389
    %v1104 = vunpack.c.h.b16 %v389
    %v1105 = vunpack.c.l.b16 %v390
    %v1106 = vunpack.c.h.b16 %v390
    %v1107 = vunpack.c.l.b16 %v391
    %v1108 = vunpack.c.h.b16 %v391
    %v1109 = vunpack.c.l.b16 %v392
    %v1110 = vunpack.c.h.b16 %v392
    %v1111 = vunpack.c.l.b16 %v393
    %v1112 = vunpack.c.h.b16 %v393
    %v1113 = vunpack.c.l.b16 %v394
    %v1114 = vunpack.c.h.b16 %v394
    %v1115 = vunpack.c.l.b16 %v395
    %v1116 = vunpack.c.h.b16 %v395
    %v1117 = vunpack.c.l.b16 %v396
    %v1118 = vunpack.c.h.b16 %v396
    %v1119 = vunpack.c.l.b16 %v397
    %v1120 = vunpack.c.h.b16 %v397
    %v1121 = vunpack.c.l.b16 %v398
    %v1122 = vunpack.c.h.b16 %v398
    %v1123 = vunpack.c.l.b16 %v399
    %v1124 = vunpack.c.h.b16 %v399
    %v1125 = vunpack.c.l.b16 %v400
    %v1126 = vunpack.c.h.b16 %v400
    %v1127 = vunpack.c.l.b16 %v401
    %v1128 = vunpack.c.h.b16 %v401
    %v1129 = vunpack.c.l.b16 %v402
    %v1130 = vunpack.c.h.b16 %v402
    %v1131 = vunpack.c.l.b16 %v403
    %v1132 = vunpack.c.h.b16 %v403
    %v1133 = vunpack.c.l.b16 %v404
    %v1134 = vunpack.c.h.b16 %v404
    %v1135 = vunpack.c.l.b16 %v405
    %v1136 = vunpack.c.h.b16 %v405
    %v1137 = vunpack.c.l.b16 %v406
    %v1138 = vunpack.c.h.b16 %v406
    %v1139 = vunpack.c.l.b16 %v407
    %v1140 = vunpack.c.h.b16 %v407
    %v1141 = vunpack.c.l.b16 %v408
    %v1142 = vunpack.c.h.b16 %v408
    %v1143 = vunpack.c.l.b16 %v409
    %v1144 = vunpack.c.h.b16 %v409
    %v1145 = vunpack.c.l.b16 %v410
    %v1146 = vunpack.c.h.b16 %v410
    %v1147 = vunpack.c.l.b16 %v411
    %v1148 = vunpack.c.h.b16 %v411
    %v1149 = vunpack.c.l.b16 %v412
    %v1150 = vunpack.c.h.b16 %v412
    %v1151 = vunpack.c.l.b16 %v413
    %v1152 = vunpack.c.h.b16 %v413
    %v1153 = vunpack.c.l.b16 %v414
    %v1154 = vunpack.c.h.b16 %v414
    %v1155 = vunpack.c.l.b16 %v415
    %v1156 = vunpack.c.h.b16 %v415
    %v1157 = vunpack.c.l.b16 %v416
    %v1158 = vunpack.c.h.b16 %v416
    %v1159 = vunpack.c.l.b16 %v417
    %v1160 = vunpack.c.h.b16 %v417
    %v1161 = vunpack.c.l.b16 %v418
    %v1162 = vunpack.c.h.b16 %v418
    %v1163 = vunpack.c.l.b16 %v419
    %v1164 = vunpack.c.h.b16 %v419
    %v1165 = vunpack.c.l.b16 %v420
    %v1166 = vunpack.c.h.b16 %v420
    %v1167 = vunpack.c.l.b16 %v421
    %v1168 = vunpack.c.h.b16 %v421
    %v1169 = vunpack.c.l.b16 %v422
    %v1170 = vunpack.c.h.b16 %v422
    %v1171 = vunpack.c.l.b16 %v423
    %v1172 = vunpack.c.h.b16 %v423
    %v1173 = vunpack.c.l.b16 %v424
    %v1174 = vunpack.c.h.b16 %v424
    %v1175 = vunpack.c.l.b16 %v425
    %v1176 = vunpack.c.h.b16 %v425
    %v1177 = vunpack.c.l.b16 %v426
    %v1178 = vunpack.c.h.b16 %v426
    %v1179 = vunpack.c.l.b16 %v427
    %v1180 = vunpack.c.h.b16 %v427
    %v1181 = vunpack.c.l.b16 %v428
    %v1182 = vunpack.c.h.b16 %v428
    %v1183 = vunpack.c.l.b16 %v429
    %v1184 = vunpack.c.h.b16 %v429
    %v1185 = vunpack.c.l.b16 %v430
    %v1186 = vunpack.c.h.b16 %v430
    %v1187 = vunpack.c.l.b16 %v431
    %v1188 = vunpack.c.h.b16 %v431
    %v1189 = vunpack.c.l.b16 %v432
    %v1190 = vunpack.c.h.b16 %v432
    %v1191 = vunpack.c.l.b16 %v433
    %v1192 = vunpack.c.h.b16 %v433
    %v1193 = vunpack.c.l.b16 %v434
    %v1194 = vunpack.c.h.b16 %v434
    %v1195 = vunpack.c.l.b16 %v435
    %v1196 = vunpack.c.h.b16 %v435
    %v1197 = vunpack.c.l.b16 %v436
    %v1198 = vunpack.c.h.b16 %v436
    %v1199 = vunpack.c.l.b16 %v437
    %v1200 = vunpack.c.h.b16 %v437
    %v1201 = vunpack.c.l.b16 %v438
    %v1202 = vunpack.c.h.b16 %v438
    %v1203 = vunpack.c.l.b16 %v439
    %v1204 = vunpack.c.h.b16 %v439
    %v1205 = vunpack.c.l.b16 %v440
    %v1206 = vunpack.c.h.b16 %v440
    %v1207 = vunpack.c.l.b16 %v441
    %v1208 = vunpack.c.h.b16 %v441
    %v1209 = vunpack.c.l.b16 %v442
    %v1210 = vunpack.c.h.b16 %v442
    %v1211 = vunpack.c.l.b16 %v443
    %v1212 = vunpack.c.h.b16 %v443
    %v1213 = vunpack.c.l.b16 %v444
    %v1214 = vunpack.c.h.b16 %v444
    %v1215 = vunpack.c.l.b16 %v445
    %v1216 = vunpack.c.h.b16 %v445
    %v1217 = vunpack.c.l.b16 %v446
    %v1218 = vunpack.c.h.b16 %v446
    %v1219 = vunpack.c.l.b16 %v447
    %v1220 = vunpack.c.h.b16 %v447
    %v1221 = vunpack.c.l.b16 %v448
    %v1222 = vunpack.c.h.b16 %v448
    %v1223 = vunpack.c.l.b16 %v449
    %v1224 = vunpack.c.h.b16 %v449
    %v1225 = vunpack.c.l.b16 %v450
    %v1226 = vunpack.c.h.b16 %v450
    %v1227 = vunpack.c.l.b16 %v451
    %v1228 = vunpack.c.h.b16 %v451
    %v1229 = vunpack.c.l.b16 %v452
    %v1230 = vunpack.c.h.b16 %v452
    %v1231 = vunpack.c.l.b16 %v453
    %v1232 = vunpack.c.h.b16 %v453
    %v1233 = vunpack.c.l.b16 %v454
    %v1234 = vunpack.c.h.b16 %v454
    %v1235 = vunpack.c.l.b16 %v455
    %v1236 = vunpack.c.h.b16 %v455
    %v1237 = vunpack.c.l.b16 %v456
    %v1238 = vunpack.c.h.b16 %v456
    %v1239 = vunpack.c.l.b16 %v457
    %v1240 = vunpack.c.h.b16 %v457
    %v1241 = vunpack.c.l.b16 %v458
    %v1242 = vunpack.c.h.b16 %v458
    %v1243 = vunpack.c.l.b16 %v459
    %v1244 = vunpack.c.h.b16 %v459
    %v1245 = vunpack.c.l.b16 %v460
    %v1246 = vunpack.c.h.b16 %v460
    %v1247 = vunpack.c.l.b16 %v461
    %v1248 = vunpack.c.h.b16 %v461
    %v1249 = vunpack.c.l.b16 %v462
    %v1250 = vunpack.c.h.b16 %v462
    %v1251 = vunpack.c.l.b16 %v463
    %v1252 = vunpack.c.h.b16 %v463
    %v1253 = vunpack.c.l.b16 %v464
    %v1254 = vunpack.c.h.b16 %v464
    %v1255 = vunpack.c.l.b16 %v465
    %v1256 = vunpack.c.h.b16 %v465
    %v1257 = vunpack.c.l.b16 %v466
    %v1258 = vunpack.c.h.b16 %v466
    %v1259 = vunpack.c.l.b16 %v467
    %v1260 = vunpack.c.h.b16 %v467
    %v1261 = vunpack.c.l.b16 %v468
    %v1262 = vunpack.c.h.b16 %v468
    %v1263 = vunpack.c.l.b16 %v469
    %v1264 = vunpack.c.h.b16 %v469
    %v1265 = vunpack.c.l.b16 %v470
    %v1266 = vunpack.c.h.b16 %v470
    %v1267 = vunpack.c.l.b16 %v471
    %v1268 = vunpack.c.h.b16 %v471
    %v1269 = vunpack.c.l.b16 %v472
    %v1270 = vunpack.c.h.b16 %v472
    %v1271 = vunpack.c.l.b16 %v473
    %v1272 = vunpack.c.h.b16 %v473
    %v1273 = vunpack.c.l.b16 %v474
    %v1274 = vunpack.c.h.b16 %v474
    %v1275 = vunpack.c.l.b16 %v475
    %v1276 = vunpack.c.h.b16 %v475
    %v1277 = vunpack.c.l.b16 %v476
    %v1278 = vunpack.c.h.b16 %v476
    %v1279 = vunpack.c.l.b16 %v477
    %v1280 = vunpack.c.h.b16 %v477
    %v1281 = vunpack.c.l.b16 %v478
    %v1282 = vunpack.c.h.b16 %v478
    %v1283 = vunpack.c.l.b16 %v479
    %v1284 = vunpack.c.h.b16 %v479
    %v1285 = vunpack.c.l.b16 %v480
    %v1286 = vunpack.c.h.b16 %v480
    %v1287 = vunpack.c.l.b16 %v481
    %v1288 = vunpack.c.h.b16 %v481
    %v1289 = vunpack.c.l.b16 %v482
    %v1290 = vunpack.c.h.b16 %v482
    %v1291 = vunpack.c.l.b16 %v483
    %v1292 = vunpack.c.h.b16 %v483
    %v1293 = vunpack.c.l.b16 %v484
    %v1294 = vunpack.c.h.b16 %v484
    %v1295 = vunpack.c.l.b16 %v485
    %v1296 = vunpack.c.h.b16 %v485
    %v1297 = vunpack.c.l.b16 %v486
    %v1298 = vunpack.c.h.b16 %v486
    %v1299 = vunpack.c.l.b16 %v487
    %v1300 = vunpack.c.h.b16 %v487
    %v1301 = vunpack.c.l.b16 %v488
    %v1302 = vunpack.c.h.b16 %v488
    %v1303 = vunpack.c.l.b16 %v489
    %v1304 = vunpack.c.h.b16 %v489
    %v1305 = vunpack.c.l.b16 %v490
    %v1306 = vunpack.c.h.b16 %v490
    %v1307 = vunpack.c.l.b16 %v491
    %v1308 = vunpack.c.h.b16 %v491
    %v1309 = vunpack.c.l.b16 %v492
    %v1310 = vunpack.c.h.b16 %v492
    %v1311 = vunpack.c.l.b16 %v493
    %v1312 = vunpack.c.h.b16 %v493
    %v1313 = vunpack.c.l.b16 %v494
    %v1314 = vunpack.c.h.b16 %v494
    %v1315 = vunpack.c.l.b16 %v495
    %v1316 = vunpack.c.h.b16 %v495
    %v1317 = vunpack.c.l.b16 %v496
    %v1318 = vunpack.c.h.b16 %v496
    %v1319 = vunpack.c.l.b16 %v497
    %v1320 = vunpack.c.h.b16 %v497
    %v1321 = vunpack.c.l.b16 %v498
    %v1322 = vunpack.c.h.b16 %v498
    %v1323 = vunpack.c.l.b16 %v499
    %v1324 = vunpack.c.h.b16 %v499
    %v1325 = vunpack.c.l.b16 %v500
    %v1326 = vunpack.c.h.b16 %v500
    %v1327 = vunpack.c.l.b16 %v501
    %v1328 = vunpack.c.h.b16 %v501
    %v1329 = vunpack.c.l.b16 %v502
    %v1330 = vunpack.c.h.b16 %v502
    %v1331 = vunpack.c.l.b16 %v503
    %v1332 = vunpack.c.h.b16 %v503
    %v1333 = vunpack.c.l.b16 %v504
    %v1334 = vunpack.c.h.b16 %v504
    %v1335 = vunpack.c.l.b16 %v505
    %v1336 = vunpack.c.h.b16 %v505
    %v1337 = vunpack.c.l.b16 %v506
    %v1338 = vunpack.c.h.b16 %v506
    %v1339 = vunpack.c.l.b16 %v507
    %v1340 = vunpack.c.h.b16 %v507
    %v1341 = vunpack.c.l.b16 %v508
    %v1342 = vunpack.c.h.b16 %v508
    %v1343 = vunpack.c.l.b16 %v509
    %v1344 = vunpack.c.h.b16 %v509
    %v1345 = vunpack.c.l.b16 %v510
    %v1346 = vunpack.c.h.b16 %v510
    %v1347 = vunpack.c.l.b16 %v511
    %v1348 = vunpack.c.h.b16 %v511
    %v1349 = vunpack.c.l.b16 %v512
    %v1350 = vunpack.c.h.b16 %v512
    %v1351 = vunpack.c.l.b16 %v513
    %v1352 = vunpack.c.h.b16 %v513
    %v1353 = vunpack.c.l.b16 %v514
    %v1354 = vunpack.c.h.b16 %v514
    %v1355 = vunpack.c.l.b16 %v515
    %v1356 = vunpack.c.h.b16 %v515
    %v1357 = vunpack.c.l.b16 %v516
    %v1358 = vunpack.c.h.b16 %v516
    %v1359 = vunpack.c.l.b16 %v517
    %v1360 = vunpack.c.h.b16 %v517
    %v1361 = vunpack.c.l.b16 %v518
    %v1362 = vunpack.c.h.b16 %v518
    %v1363 = vunpack.c.l.b16 %v519
    %v1364 = vunpack.c.h.b16 %v519
    %v1365 = vunpack.c.l.b16 %v520
    %v1366 = vunpack.c.h.b16 %v520
    %v1367 = vunpack.c.l.b16 %v521
    %v1368 = vunpack.c.h.b16 %v521
    %v1369 = vunpack.c.l.b16 %v522
    %v1370 = vunpack.c.h.b16 %v522
    %v1371 = vunpack.c.l.b16 %v523
    %v1372 = vunpack.c.h.b16 %v523
    %v1373 = vunpack.c.l.b16 %v524
    %v1374 = vunpack.c.h.b16 %v524
    %v1375 = vunpack.c.l.b16 %v525
    %v1376 = vunpack.c.h.b16 %v525
    %v1377 = vunpack.c.l.b16 %v526
    %v1378 = vunpack.c.h.b16 %v526
    %v1379 = vunpack.c.l.b16 %v527
    %v1380 = vunpack.c.h.b16 %v527
    %v1381 = vunpack.c.l.b16 %v528
    %v1382 = vunpack.c.h.b16 %v528
    %v1383 = vunpack.c.l.b16 %v529
    %v1384 = vunpack.c.h.b16 %v529
    %v1385 = vunpack.c.l.b16 %v530
    %v1386 = vunpack.c.h.b16 %v530
    %v1387 = vunpack.c.l.b16 %v531
    %v1388 = vunpack.c.h.b16 %v531
    %v1389 = vunpack.c.l.b16 %v532
    %v1390 = vunpack.c.h.b16 %v532
    %v1391 = vunpack.c.l.b16 %v533
    %v1392 = vunpack.c.h.b16 %v533
    %v1393 = vunpack.c.l.b16 %v534
    %v1394 = vunpack.c.h.b16 %v534
    %v1395 = vunpack.c.l.b16 %v535
    %v1396 = vunpack.c.h.b16 %v535
    %v1397 = vunpack.c.l.b16 %v536
    %v1398 = vunpack.c.h.b16 %v536
    %v1399 = vunpack.c.l.b16 %v537
    %v1400 = vunpack.c.h.b16 %v537
    %v1401 = vunpack.c.l.b16 %v538
    %v1402 = vunpack.c.h.b16 %v538
    %v1403 = vunpack.c.l.b16 %v539
    %v1404 = vunpack.c.h.b16 %v539
    %v1405 = vunpack.c.l.b16 %v540
    %v1406 = vunpack.c.h.b16 %v540
    %v1407 = vunpack.c.l.b16 %v541
    %v1408 = vunpack.c.h.b16 %v541
    %v1409 = vunpack.c.l.b16 %v542
    %v1410 = vunpack.c.h.b16 %v542
    %v1411 = vunpack.c.l.b16 %v543
    %v1412 = vunpack.c.h.b16 %v543
    %v1413 = vunpack.c.l.b16 %v544
    %v1414 = vunpack.c.h.b16 %v544
    %v1415 = vunpack.c.l.b16 %v545
    %v1416 = vunpack.c.h.b16 %v545
    %v1417 = vunpack.c.l.b16 %v546
    %v1418 = vunpack.c.h.b16 %v546
    %v1419 = vunpack.c.l.b16 %v547
    %v1420 = vunpack.c.h.b16 %v547
    %v1421 = vunpack.c.l.b16 %v548
    %v1422 = vunpack.c.h.b16 %v548
    %v1423 = vunpack.c.l.b16 %v549
    %v1424 = vunpack.c.h.b16 %v549
    %v1425 = vunpack.c.l.b16 %v550
    %v1426 = vunpack.c.h.b16 %v550
    %v1427 = vunpack.c.l.b16 %v551
    %v1428 = vunpack.c.h.b16 %v551
    %v1429 = vunpack.c.l.b16 %v552
    %v1430 = vunpack.c.h.b16 %v552
    %v1431 = vunpack.c.l.b16 %v553
    %v1432 = vunpack.c.h.b16 %v553
    %v1433 = vunpack.c.l.b16 %v554
    %v1434 = vunpack.c.h.b16 %v554
    %v1435 = vunpack.c.l.b16 %v555
    %v1436 = vunpack.c.h.b16 %v555
    %v1437 = vunpack.c.l.b16 %v556
    %v1438 = vunpack.c.h.b16 %v556
    %v1439 = vunpack.c.l.b16 %v557
    %v1440 = vunpack.c.h.b16 %v557
    %v1441 = vunpack.c.l.b16 %v558
    %v1442 = vunpack.c.h.b16 %v558
    %v1443 = vunpack.c.l.b16 %v559
    %v1444 = vunpack.c.h.b16 %v559
    %v1445 = vunpack.c.l.b16 %v560
    %v1446 = vunpack.c.h.b16 %v560
    %v1447 = vunpack.c.l.b16 %v561
    %v1448 = vunpack.c.h.b16 %v561
    %v1449 = vunpack.c.l.b16 %v562
    %v1450 = vunpack.c.h.b16 %v562
    %v1451 = vunpack.c.l.b16 %v563
    %v1452 = vunpack.c.h.b16 %v563
    %v1453 = vunpack.c.l.b16 %v564
    %v1454 = vunpack.c.h.b16 %v564
    %v1455 = vunpack.c.l.b16 %v565
    %v1456 = vunpack.c.h.b16 %v565
    %v1457 = vunpack.c.l.b16 %v566
    %v1458 = vunpack.c.h.b16 %v566
    %v1459 = vunpack.c.l.b16 %v567
    %v1460 = vunpack.c.h.b16 %v567
    %v1461 = vunpack.c.l.b16 %v568
    %v1462 = vunpack.c.h.b16 %v568
    %v1463 = vunpack.c.l.b16 %v569
    %v1464 = vunpack.c.h.b16 %v569
    %v1465 = vunpack.c.l.b16 %v570
    %v1466 = vunpack.c.h.b16 %v570
    %v1467 = vunpack.c.l.b16 %v571
    %v1468 = vunpack.c.h.b16 %v571
    %v1469 = vunpack.c.l.b16 %v572
    %v1470 = vunpack.c.h.b16 %v572
    %v1471 = vunpack.c.l.b16 %v573
    %v1472 = vunpack.c.h.b16 %v573
    %v1473 = vunpack.c.l.b16 %v574
    %v1474 = vunpack.c.h.b16 %v574
    %v1475 = vunpack.c.l.b16 %v575
    %v1476 = vunpack.c.h.b16 %v575
    %v1477 = vunpack.c.l.b16 %v576
    %v1478 = vunpack.c.h.b16 %v576
    %v1479 = vunpack.c.l.b16 %v577
    %v1480 = vunpack.c.h.b16 %v577
    %v1481 = vunpack.c.l.b16 %v578
    %v1482 = vunpack.c.h.b16 %v578
    %v1483 = vunpack.c.l.b16 %v579
    %v1484 = vunpack.c.h.b16 %v579
    %v1485 = vunpack.c.l.b16 %v580
    %v1486 = vunpack.c.h.b16 %v580
    %v1487 = vunpack.c.l.b16 %v581
    %v1488 = vunpack.c.h.b16 %v581
    %v1489 = vunpack.c.l.b16 %v582
    %v1490 = vunpack.c.h.b16 %v582
    %v1491 = vunpack.c.l.b16 %v583
    %v1492 = vunpack.c.h.b16 %v583
    %v1493 = vunpack.c.l.b16 %v584
    %v1494 = vunpack.c.h.b16 %v584
    %v1495 = vunpack.c.l.b16 %v585
    %v1496 = vunpack.c.h.b16 %v585
    %v1497 = vunpack.c.l.b16 %v586
    %v1498 = vunpack.c.h.b16 %v586
    %v1499 = vunpack.c.l.b16 %v587
    %v1500 = vunpack.c.h.b16 %v587
    %v1501 = vunpack.c.l.b16 %v588
    %v1502 = vunpack.c.h.b16 %v588
    %v1503 = vunpack.c.l.b16 %v589
    %v1504 = vunpack.c.h.b16 %v589
    %v1505 = vunpack.c.l.b16 %v590
    %v1506 = vunpack.c.h.b16 %v590
    %v1507 = vunpack.c.l.b16 %v591
    %v1508 = vunpack.c.h.b16 %v591
    %v1509 = vunpack.c.l.b16 %v592
    %v1510 = vunpack.c.h.b16 %v592
    %v1511 = vunpack.c.l.b16 %v593
    %v1512 = vunpack.c.h.b16 %v593
    %v1513 = vunpack.c.l.b16 %v594
    %v1514 = vunpack.c.h.b16 %v594
    %v1515 = vunpack.c.l.b16 %v595
    %v1516 = vunpack.c.h.b16 %v595
    %v1517 = vunpack.c.l.b16 %v596
    %v1518 = vunpack.c.h.b16 %v596
    %v1519 = vunpack.c.l.b16 %v597
    %v1520 = vunpack.c.h.b16 %v597
    %v1521 = vunpack.c.l.b16 %v598
    %v1522 = vunpack.c.h.b16 %v598
    %v1523 = vunpack.c.l.b16 %v599
    %v1524 = vunpack.c.h.b16 %v599
    %v1525 = vunpack.c.l.b16 %v600
    %v1526 = vunpack.c.h.b16 %v600
    %v1527 = vunpack.c.l.b16 %v601
    %v1528 = vunpack.c.h.b16 %v601
    %v1529 = vunpack.c.l.b16 %v602
    %v1530 = vunpack.c.h.b16 %v602
    %v1531 = vunpack.c.l.b16 %v603
    %v1532 = vunpack.c.h.b16 %v603
    %v1533 = vunpack.c.l.b16 %v604
    %v1534 = vunpack.c.h.b16 %v604
    %v1535 = vunpack.c.l.b16 %v605
    %v1536 = vunpack.c.h.b16 %v605
    %v1537 = vunpack.c.l.b16 %v606
    %v1538 = vunpack.c.h.b16 %v606
    %v1539 = vunpack.c.l.b16 %v607
    %v1540 = vunpack.c.h.b16 %v607
    %v1541 = vunpack.c.l.b16 %v608
    %v1542 = vunpack.c.h.b16 %v608
    %v1543 = vunpack.c.l.b16 %v609
    %v1544 = vunpack.c.h.b16 %v609
    %v1545 = vunpack.c.l.b16 %v610
    %v1546 = vunpack.c.h.b16 %v610
    %v1547 = vunpack.c.l.b16 %v611
    %v1548 = vunpack.c.h.b16 %v611
    %v1549 = vunpack.c.l.b16 %v612
    %v1550 = vunpack.c.h.b16 %v612
    %v1551 = vunpack.c.l.b16 %v613
    %v1552 = vunpack.c.h.b16 %v613
    %v1553 = vunpack.c.l.b16 %v614
    %v1554 = vunpack.c.h.b16 %v614
    %v1555 = vunpack.c.l.b16 %v615
    %v1556 = vunpack.c.h.b16 %v615
    %v1557 = vunpack.c.l.b16 %v616
    %v1558 = vunpack.c.h.b16 %v616
    %v1559 = vunpack.c.l.b16 %v617
    %v1560 = vunpack.c.h.b16 %v617
    %v1561 = vunpack.c.l.b16 %v618
    %v1562 = vunpack.c.h.b16 %v618
    %v1563 = vunpack.c.l.b16 %v619
    %v1564 = vunpack.c.h.b16 %v619
    %v1565 = vunpack.c.l.b16 %v620
    %v1566 = vunpack.c.h.b16 %v620
    %v1567 = vunpack.c.l.b16 %v621
    %v1568 = vunpack.c.h.b16 %v621
    %v1569 = vunpack.c.l.b16 %v622
    %v1570 = vunpack.c.h.b16 %v622
    %v1571 = vunpack.c.l.b16 %v623
    %v1572 = vunpack.c.h.b16 %v623
    %v1573 = vunpack.c.l.b16 %v624
    %v1574 = vunpack.c.h.b16 %v624
    %v1575 = vunpack.c.l.b16 %v625
    %v1576 = vunpack.c.h.b16 %v625
    %v1577 = vunpack.c.l.b16 %v626
    %v1578 = vunpack.c.h.b16 %v626
    %v1579 = vunpack.c.l.b16 %v627
    %v1580 = vunpack.c.h.b16 %v627
    %v1581 = vunpack.c.l.b16 %v628
    %v1582 = vunpack.c.h.b16 %v628
    %v1583 = vunpack.c.l.b16 %v629
    %v1584 = vunpack.c.h.b16 %v629
    %v1585 = vunpack.c.l.b16 %v630
    %v1586 = vunpack.c.h.b16 %v630
    %v1587 = vunpack.c.l.b16 %v631
    %v1588 = vunpack.c.h.b16 %v631
    %v1589 = vunpack.c.l.b16 %v632
    %v1590 = vunpack.c.h.b16 %v632
    %v1591 = vunpack.c.l.b16 %v633
    %v1592 = vunpack.c.h.b16 %v633
    %v1593 = vunpack.c.l.b16 %v634
    %v1594 = vunpack.c.h.b16 %v634
    %v1595 = vunpack.c.l.b16 %v635
    %v1596 = vunpack.c.h.b16 %v635
    %v1597 = vunpack.c.l.b16 %v636
    %v1598 = vunpack.c.h.b16 %v636
    %v1599 = vunpack.c.l.b16 %v637
    %v1600 = vunpack.c.h.b16 %v637
    %v1601 = vunpack.c.l.b16 %v638
    %v1602 = vunpack.c.h.b16 %v638
    %v1603 = vunpack.c.l.b16 %v639
    %v1604 = vunpack.c.h.b16 %v639
    %v1605 = vunpack.c.l.b16 %v640
    %v1606 = vunpack.c.h.b16 %v640
    %v1607 = vunpack.c.l.b16 %v641
    %v1608 = vunpack.c.h.b16 %v641
    %v1609 = vunpack.c.l.b16 %v642
    %v1610 = vunpack.c.h.b16 %v642
    %v1611 = vunpack.c.l.b16 %v643
    %v1612 = vunpack.c.h.b16 %v643
    %v1613 = vunpack.c.l.b16 %v644
    %v1614 = vunpack.c.h.b16 %v644
    %v1615 = vunpack.c.l.b16 %v645
    %v1616 = vunpack.c.h.b16 %v645
    %v1617 = vunpack.c.l.b16 %v646
    %v1618 = vunpack.c.h.b16 %v646
    %v1619 = vunpack.c.l.b16 %v647
    %v1620 = vunpack.c.h.b16 %v647
    %v1621 = vunpack.c.l.b16 %v648
    %v1622 = vunpack.c.h.b16 %v648
    %v1623 = vunpack.c.l.b16 %v649
    %v1624 = vunpack.c.h.b16 %v649
    %v1625 = vunpack.c.l.b16 %v650
    %v1626 = vunpack.c.h.b16 %v650
    %v1627 = vunpack.c.l.b16 %v651
    %v1628 = vunpack.c.h.b16 %v651
    %v1629 = vunpack.c.l.b16 %v652
    %v1630 = vunpack.c.h.b16 %v652
    %v1631 = vunpack.c.l.b16 %v653
    %v1632 = vunpack.c.h.b16 %v653
    %v1633 = vunpack.c.l.b16 %v654
    %v1634 = vunpack.c.h.b16 %v654
    %v1635 = vunpack.c.l.b16 %v655
    %v1636 = vunpack.c.h.b16 %v655
    %v1637 = vunpack.c.l.b16 %v656
    %v1638 = vunpack.c.h.b16 %v656
    %v1639 = vunpack.c.l.b16 %v657
    %v1640 = vunpack.c.h.b16 %v657
    %v1641 = vunpack.c.l.b16 %v658
    %v1642 = vunpack.c.h.b16 %v658
    %v1643 = vpack.c.b16 %v1013, %v1003
    %v1644 = vpack.c.b16 %v1014, %v1004
    %v1645 = vpack.c.b16 %v1015, %v1005
    %v1646 = vpack.c.b16 %v1016, %v1006
    %v1647 = vpack.c.b16 %v1017, %v1007
    %v1648 = vpack.c.b16 %v1018, %v1008
    %v1649 = vpack.c.b16 %v1019, %v1009
    %v1650 = vpack.c.b16 %v1020, %v1010
    %v1651 = vpack.c.b16 %v1021, %v1011
    %v1652 = vpack.c.b16 %v1022, %v1012
    %v1653 = vpack.c.b16 %v1033, %v1023
    %v1654 = vpack.c.b16 %v1034, %v1024
    %v1655 = vpack.c.b16 %v1035, %v1025
    %v1656 = vpack.c.b16 %v1036, %v1026
    %v1657 = vpack.c.b16 %v1037, %v1027
    %v1658 = vpack.c.b16 %v1038, %v1028
    %v1659 = vpack.c.b16 %v1039, %v1029
    %v1660 = vpack.c.b16 %v1040, %v1030
    %v1661 = vpack.c.b16 %v1041, %v1031
    %v1662 = vpack.c.b16 %v1042, %v1032
    %v1663 = vpack.c.b16 %v1053, %v1043
    %v1664 = vpack.c.b16 %v1054, %v1044
    %v1665 = vpack.c.b16 %v1055, %v1045
    %v1666 = vpack.c.b16 %v1056, %v1046
    %v1667 = vpack.c.b16 %v1057, %v1047
    %v1668 = vpack.c.b16 %v1058, %v1048
    %v1669 = vpack.c.b16 %v1059, %v1049
    %v1670 = vpack.c.b16 %v1060, %v1050
    %v1671 = vpack.c.b16 %v1061, %v1051
    %v1672 = vpack.c.b16 %v1062, %v1052
    %v1673 = vpack.c.b16 %v1073, %v1063
    %v1674 = vpack.c.b16 %v1074, %v1064
    %v1675 = vpack.c.b16 %v1075, %v1065
    %v1676 = vpack.c.b16 %v1076, %v1066
    %v1677 = vpack.c.b16 %v1077, %v1067
    %v1678 = vpack.c.b16 %v1078, %v1068
    %v1679 = vpack.c.b16 %v1079, %v1069
    %v1680 = vpack.c.b16 %v1080, %v1070
    %v1681 = vpack.c.b16 %v1081, %v1071
    %v1682 = vpack.c.b16 %v1082, %v1072
    %v1683 = vpack.c.b16 %v1093, %v1083
    %v1684 = vpack.c.b16 %v1094, %v1084
    %v1685 = vpack.c.b16 %v1095, %v1085
    %v1686 = vpack.c.b16 %v1096, %v1086
    %v1687 = vpack.c.b16 %v1097, %v1087
    %v1688 = vpack.c.b16 %v1098, %v1088
    %v1689 = vpack.c.b16 %v1099, %v1089
    %v1690 = vpack.c.b16 %v1100, %v1090
    %v1691 = vpack.c.b16 %v1101, %v1091
    %v1692 = vpack.c.b16 %v1102, %v1092
    %v1693 = vpack.c.b16 %v1113, %v1103
    %v1694 = vpack.c.b16 %v1114, %v1104
    %v1695 = vpack.c.b16 %v1115, %v1105
    %v1696 = vpack.c.b16 %v1116, %v1106
    %v1697 = vpack.c.b16 %v1117, %v1107
    %v1698 = vpack.c.b16 %v1118, %v1108
    %v1699 = vpack.c.b16 %v1119, %v1109
    %v1700 = vpack.c.b16 %v1120, %v1110
    %v1701 = vpack.c.b16 %v1121, %v1111
    %v1702 = vpack.c.b16 %v1122, %v1112
    %v1703 = vpack.c.b16 %v1133, %v1123
    %v1704 = vpack.c.b16 %v1134, %v1124
    %v1705 = vpack.c.b16 %v1135, %v1125
    %v1706 = vpack.c.b16 %v1136, %v1126
    %v1707 = vpack.c.b16 %v1137, %v1127
    %v1708 = vpack.c.b16 %v1138, %v1128
    %v1709 = vpack.c.b16 %v1139, %v1129
    %v1710 = vpack.c.b16 %v1140, %v1130
    %v1711 = vpack.c.b16 %v1141, %v1131
    %v1712 = vpack.c.b16 %v1142, %v1132
    %v1713 = vpack.c.b16 %v1153, %v1143
    %v1714 = vpack.c.b16 %v1154, %v1144
    %v1715 = vpack.c.b16 %v1155, %v1145
    %v1716 = vpack.c.b16 %v1156, %v1146
    %v1717 = vpack.c.b16 %v1157, %v1147
    %v1718 = vpack.c.b16 %v1158, %v1148
    %v1719 = vpack.c.b16 %v1159, %v1149
    %v1720 = vpack.c.b16 %v1160, %v1150
    %v1721 = vpack.c.b16 %v1161, %v1151
    %v1722 = vpack.c.b16 %v1162, %v1152
    %v1723 = vpack.c.b16 %v1173, %v1163
    %v1724 = vpack.c.b16 %v1174, %v1164
    %v1725 = vpack.c.b16 %v1175, %v1165
    %v1726 = vpack.c.b16 %v1176, %v1166
    %v1727 = vpack.c.b16 %v1177, %v1167
    %v1728 = vpack.c.b16 %v1178, %v1168
    %v1729 = vpack.c.b16 %v1179, %v1169
    %v1730 = vpack.c.b16 %v1180, %v1170
    %v1731 = vpack.c.b16 %v1181, %v1171
    %v1732 = vpack.c.b16 %v1182, %v1172
    %v1733 = vpack.c.b16 %v1193, %v1183
    %v1734 = vpack.c.b16 %v1194, %v1184
    %v1735 = vpack.c.b16 %v1195, %v1185
    %v1736 = vpack.c.b16 %v1196, %v1186
    %v1737 = vpack.c.b16 %v1197, %v1187
    %v1738 = vpack.c.b16 %v1198, %v1188
    %v1739 = vpack.c.b16 %v1199, %v1189
    %v1740 = vpack.c.b16 %v1200, %v1190
    %v1741 = vpack.c.b16 %v1201, %v1191
    %v1742 = vpack.c.b16 %v1202, %v1192
    %v1743 = vpack.c.b16 %v1213, %v1203
    %v1744 = vpack.c.b16 %v1214, %v1204
    %v1745 = vpack.c.b16 %v1215, %v1205
    %v1746 = vpack.c.b16 %v1216, %v1206
    %v1747 = vpack.c.b16 %v1217, %v1207
    %v1748 = vpack.c.b16 %v1218, %v1208
    %v1749 = vpack.c.b16 %v1219, %v1209
    %v1750 = vpack.c.b16 %v1220, %v1210
    %v1751 = vpack.c.b16 %v1221, %v1211
    %v1752 = vpack.c.b16 %v1222, %v1212
    %v1753 = vpack.c.b16 %v1233, %v1223
    %v1754 = vpack.c.b16 %v1234, %v1224
    %v1755 = vpack.c.b16 %v1235, %v1225
    %v1756 = vpack.c.b16 %v1236, %v1226
    %v1757 = vpack.c.b16 %v1237, %v1227
    %v1758 = vpack.c.b16 %v1238, %v1228
    %v1759 = vpack.c.b16 %v1239, %v1229
    %v1760 = vpack.c.b16 %v1240, %v1230
    %v1761 = vpack.c.b16 %v1241, %v1231
    %v1762 = vpack.c.b16 %v1242, %v1232
    %v1763 = vpack.c.b16 %v1253, %v1243
    %v1764 = vpack.c.b16 %v1254, %v1244
    %v1765 = vpack.c.b16 %v1255, %v1245
    %v1766 = vpack.c.b16 %v1256, %v1246
    %v1767 = vpack.c.b16 %v1257, %v1247
    %v1768 = vpack.c.b16 %v1258, %v1248
    %v1769 = vpack.c.b16 %v1259, %v1249
    %v1770 = vpack.c.b16 %v1260, %v1250
    %v1771 = vpack.c.b16 %v1261, %v1251
    %v1772 = vpack.c.b16 %v1262, %v1252
    %v1773 = vpack.c.b16 %v1273, %v1263
    %v1774 = vpack.c.b16 %v1274, %v1264
    %v1775 = vpack.c.b16 %v1275, %v1265
    %v1776 = vpack.c.b16 %v1276, %v1266
    %v1777 = vpack.c.b16 %v1277, %v1267
    %v1778 = vpack.c.b16 %v1278, %v1268
    %v1779 = vpack.c.b16 %v1279, %v1269
    %v1780 = vpack.c.b16 %v1280, %v1270
    %v1781 = vpack.c.b16 %v1281, %v1271
    %v1782 = vpack.c.b16 %v1282, %v1272
    %v1783 = vpack.c.b16 %v1293, %v1283
    %v1784 = vpack.c.b16 %v1294, %v1284
    %v1785 = vpack.c.b16 %v1295, %v1285
    %v1786 = vpack.c.b16 %v1296, %v1286
    %v1787 = vpack.c.b16 %v1297, %v1287
    %v1788 = vpack.c.b16 %v1298, %v1288
    %v1789 = vpack.c.b16 %v1299, %v1289
    %v1790 = vpack.c.b16 %v1300, %v1290
    %v1791 = vpack.c.b16 %v1301, %v1291
    %v1792 = vpack.c.b16 %v1302, %v1292
    %v1793 = vpack.c.b16 %v1313, %v1303
    %v1794 = vpack.c.b16 %v1314, %v1304
    %v1795 = vpack.c.b16 %v1315, %v1305
    %v1796 = vpack.c.b16 %v1316, %v1306
    %v1797 = vpack.c.b16 %v1317, %v1307
    %v1798 = vpack.c.b16 %v1318, %v1308
    %v1799 = vpack.c.b16 %v1319, %v1309
    %v1800 = vpack.c.b16 %v1320, %v1310
    %v1801 = vpack.c.b16 %v1321, %v1311
    %v1802 = vpack.c.b16 %v1322, %v1312
    %v1803 = vpack.c.b16 %v1333, %v1323
    %v1804 = vpack.c.b16 %v1334, %v1324
    %v1805 = vpack.c.b16 %v1335, %v1325
    %v1806 = vpack.c.b16 %v1336, %v1326
    %v1807 = vpack.c.b16 %v1337, %v1327
    %v1808 = vpack.c.b16 %v1338, %v1328
    %v1809 = vpack.c.b16 %v1339, %v1329
    %v1810 = vpack.c.b16 %v1340, %v1330
    %v1811 = vpack.c.b16 %v1341, %v1331
    %v1812 = vpack.c.b16 %v1342, %v1332
    %v1813 = vpack.c.b16 %v1353, %v1343
    %v1814 = vpack.c.b16 %v1354, %v1344
    %v1815 = vpack.c.b16 %v1355, %v1345
    %v1816 = vpack.c.b16 %v1356, %v1346
    %v1817 = vpack.c.b16 %v1357, %v1347
    %v1818 = vpack.c.b16 %v1358, %v1348
    %v1819 = vpack.c.b16 %v1359, %v1349
    %v1820 = vpack.c.b16 %v1360, %v1350
    %v1821 = vpack.c.b16 %v1361, %v1351
    %v1822 = vpack.c.b16 %v1362, %v1352
    %v1823 = vpack.c.b16 %v1373, %v1363
    %v1824 = vpack.c.b16 %v1374, %v1364
    %v1825 = vpack.c.b16 %v1375, %v1365
    %v1826 = vpack.c.b16 %v1376, %v1366
    %v1827 = vpack.c.b16 %v1377, %v1367
    %v1828 = vpack.c.b16 %v1378, %v1368
    %v1829 = vpack.c.b16 %v1379, %v1369
    %v1830 = vpack.c.b16 %v1380, %v1370
    %v1831 = vpack.c.b16 %v1381, %v1371
    %v1832 = vpack.c.b16 %v1382, %v1372
    %v1833 = vpack.c.b16 %v1393, %v1383
    %v1834 = vpack.c.b16 %v1394, %v1384
    %v1835 = vpack.c.b16 %v1395, %v1385
    %v1836 = vpack.c.b16 %v1396, %v1386
    %v1837 = vpack.c.b16 %v1397, %v1387
    %v1838 = vpack.c.b16 %v1398, %v1388
    %v1839 = vpack.c.b16 %v1399, %v1389
    %v1840 = vpack.c.b16 %v1400, %v1390
    %v1841 = vpack.c.b16 %v1401, %v1391
    %v1842 = vpack.c.b16 %v1402, %v1392
    %v1843 = vpack.c.b16 %v1413, %v1403
    %v1844 = vpack.c.b16 %v1414, %v1404
    %v1845 = vpack.c.b16 %v1415, %v1405
    %v1846 = vpack.c.b16 %v1416, %v1406
    %v1847 = vpack.c.b16 %v1417, %v1407
    %v1848 = vpack.c.b16 %v1418, %v1408
    %v1849 = vpack.c.b16 %v1419, %v1409
    %v1850 = vpack.c.b16 %v1420, %v1410
    %v1851 = vpack.c.b16 %v1421, %v1411
    %v1852 = vpack.c.b16 %v1422, %v1412
    %v1853 = vpack.c.b16 %v1433, %v1423
    %v1854 = vpack.c.b16 %v1434, %v1424
    %v1855 = vpack.c.b16 %v1435, %v1425
    %v1856 = vpack.c.b16 %v1436, %v1426
    %v1857 = vpack.c.b16 %v1437, %v1427
    %v1858 = vpack.c.b16 %v1438, %v1428
    %v1859 = vpack.c.b16 %v1439, %v1429
    %v1860 = vpack.c.b16 %v1440, %v1430
    %v1861 = vpack.c.b16 %v1441, %v1431
    %v1862 = vpack.c.b16 %v1442, %v1432
    %v1863 = vpack.c.b16 %v1453, %v1443
    %v1864 = vpack.c.b16 %v1454, %v1444
    %v1865 = vpack.c.b16 %v1455, %v1445
    %v1866 = vpack.c.b16 %v1456, %v1446
    %v1867 = vpack.c.b16 %v1457, %v1447
    %v1868 = vpack.c.b16 %v1458, %v1448
    %v1869 = vpack.c.b16 %v1459, %v1449
    %v1870 = vpack.c.b16 %v1460, %v1450
    %v1871 = vpack.c.b16 %v1461, %v1451
    %v1872 = vpack.c.b16 %v1462, %v1452
    %v1873 = vpack.c.b16 %v1473, %v1463
    %v1874 = vpack.c.b16 %v1474, %v1464
    %v1875 = vpack.c.b16 %v1475, %v1465
    %v1876 = vpack.c.b16 %v1476, %v1466
    %v1877 = vpack.c.b16 %v1477, %v1467
    %v1878 = vpack.c.b16 %v1478, %v1468
    %v1879 = vpack.c.b16 %v1479, %v1469
    %v1880 = vpack.c.b16 %v1480, %v1470
    %v1881 = vpack.c.b16 %v1481, %v1471
    %v1882 = vpack.c.b16 %v1482, %v1472
    %v1883 = vpack.c.b16 %v1493, %v1483
    %v1884 = vpack.c.b16 %v1494, %v1484
    %v1885 = vpack.c.b16 %v1495, %v1485
    %v1886 = vpack.c.b16 %v1496, %v1486
    %v1887 = vpack.c.b16 %v1497, %v1487
    %v1888 = vpack.c.b16 %v1498, %v1488
    %v1889 = vpack.c.b16 %v1499, %v1489
    %v1890 = vpack.c.b16 %v1500, %v1490
    %v1891 = vpack.c.b16 %v1501, %v1491
    %v1892 = vpack.c.b16 %v1502, %v1492
    %v1893 = vpack.c.b16 %v1513, %v1503
    %v1894 = vpack.c.b16 %v1514, %v1504
    %v1895 = vpack.c.b16 %v1515, %v1505
    %v1896 = vpack.c.b16 %v1516, %v1506
    %v1897 = vpack.c.b16 %v1517, %v1507
    %v1898 = vpack.c.b16 %v1518, %v1508
    %v1899 = vpack.c.b16 %v1519, %v1509
    %v1900 = vpack.c.b16 %v1520, %v1510
    %v1901 = vpack.c.b16 %v1521, %v1511
    %v1902 = vpack.c.b16 %v1522, %v1512
    %v1903 = vpack.c.b16 %v1533, %v1523
    %v1904 = vpack.c.b16 %v1534, %v1524
    %v1905 = vpack.c.b16 %v1535, %v1525
    %v1906 = vpack.c.b16 %v1536, %v1526
    %v1907 = vpack.c.b16 %v1537, %v1527
    %v1908 = vpack.c.b16 %v1538, %v1528
    %v1909 = vpack.c.b16 %v1539, %v1529
    %v1910 = vpack.c.b16 %v1540, %v1530
    %v1911 = vpack.c.b16 %v1541, %v1531
    %v1912 = vpack.c.b16 %v1542, %v1532
    %v1913 = vpack.c.b16 %v1553, %v1543
    %v1914 = vpack.c.b16 %v1554, %v1544
    %v1915 = vpack.c.b16 %v1555, %v1545
    %v1916 = vpack.c.b16 %v1556, %v1546
    %v1917 = vpack.c.b16 %v1557, %v1547
    %v1918 = vpack.c.b16 %v1558, %v1548
    %v1919 = vpack.c.b16 %v1559, %v1549
    %v1920 = vpack.c.b16 %v1560, %v1550
    %v1921 = vpack.c.b16 %v1561, %v1551
    %v1922 = vpack.c.b16 %v1562, %v1552
    %v1923 = vpack.c.b16 %v1573, %v1563
    %v1924 = vpack.c.b16 %v1574, %v1564
    %v1925 = vpack.c.b16 %v1575, %v1565
    %v1926 = vpack.c.b16 %v1576, %v1566
    %v1927 = vpack.c.b16 %v1577, %v1567
    %v1928 = vpack.c.b16 %v1578, %v1568
    %v1929 = vpack.c.b16 %v1579, %v1569
    %v1930 = vpack.c.b16 %v1580, %v1570
    %v1931 = vpack.c.b16 %v1581, %v1571
    %v1932 = vpack.c.b16 %v1582, %v1572
    %v1933 = vpack.c.b16 %v1593, %v1583
    %v1934 = vpack.c.b16 %v1594, %v1584
    %v1935 = vpack.c.b16 %v1595, %v1585
    %v1936 = vpack.c.b16 %v1596, %v1586
    %v1937 = vpack.c.b16 %v1597, %v1587
    %v1938 = vpack.c.b16 %v1598, %v1588
    %v1939 = vpack.c.b16 %v1599, %v1589
    %v1940 = vpack.c.b16 %v1600, %v1590
    %v1941 = vpack.c.b16 %v1601, %v1591
    %v1942 = vpack.c.b16 %v1602, %v1592
    %v1943 = vpack.c.b16 %v1613, %v1603
    %v1944 = vpack.c.b16 %v1614, %v1604
    %v1945 = vpack.c.b16 %v1615, %v1605
    %v1946 = vpack.c.b16 %v1616, %v1606
    %v1947 = vpack.c.b16 %v1617, %v1607
    %v1948 = vpack.c.b16 %v1618, %v1608
    %v1949 = vpack.c.b16 %v1619, %v1609
    %v1950 = vpack.c.b16 %v1620, %v1610
    %v1951 = vpack.c.b16 %v1621, %v1611
    %v1952 = vpack.c.b16 %v1622, %v1612
    %v1953 = vpack.c.b16 %v1633, %v1623
    %v1954 = vpack.c.b16 %v1634, %v1624
    %v1955 = vpack.c.b16 %v1635, %v1625
    %v1956 = vpack.c.b16 %v1636, %v1626
    %v1957 = vpack.c.b16 %v1637, %v1627
    %v1958 = vpack.c.b16 %v1638, %v1628
    %v1959 = vpack.c.b16 %v1639, %v1629
    %v1960 = vpack.c.b16 %v1640, %v1630
    %v1961 = vpack.c.b16 %v1641, %v1631
    %v1962 = vpack.c.b16 %v1642, %v1632
    %2283 = vmatpush.bf16.msra.mxu0 %v1713
    %2284 = vmatpush.bf16.msra.mxu0 %v1703
    %2285 = vmatpush.bf16.msra.mxu0 %v1693
    %2286 = vmatpush.bf16.msra.mxu0 %v1683
    %2287 = vmatpush.bf16.msra.mxu0 %v1673
    %2288 = vmatpush.bf16.msra.mxu0 %v1663
    %2289 = vmatpush.bf16.msra.mxu0 %v1653
    %2290 = vmatpush.bf16.msra.mxu0 %v1643
    %2291 = vmatmul.bf16.gmra.mxu0 %v335
    %v2292 = vpop.f32.mrf.mxu0
    %v2293 = vadd.f32 %v663, %v2292
    %v2294 = vpop.f32.mrf.mxu0
    %2295 = vdwg.mxu0
    %2296 = vmatpush.bf16.msra.mxu0 %v1793
    %2297 = vmatpush.bf16.msra.mxu0 %v1783
    %2298 = vmatpush.bf16.msra.mxu0 %v1773
    %2299 = vmatpush.bf16.msra.mxu0 %v1763
    %2300 = vmatpush.bf16.msra.mxu0 %v1753
    %2301 = vmatpush.bf16.msra.mxu0 %v1743
    %2302 = vmatpush.bf16.msra.mxu0 %v1733
    %2303 = vmatpush.bf16.msra.mxu0 %v1723
    %2304 = vmatmul.bf16.gmra.mxu0 %v336
    %v2305 = vpop.f32.mrf.mxu0
    %v2306 = vadd.f32 %v2293, %v2305
    %v2307 = vpop.f32.mrf.mxu0
    %2308 = vdwg.mxu0
    %2309 = vmatpush.bf16.msra.mxu0 %v1873
    %2310 = vmatpush.bf16.msra.mxu0 %v1863
    %2311 = vmatpush.bf16.msra.mxu0 %v1853
    %2312 = vmatpush.bf16.msra.mxu0 %v1843
    %2313 = vmatpush.bf16.msra.mxu0 %v1833
    %2314 = vmatpush.bf16.msra.mxu0 %v1823
    %2315 = vmatpush.bf16.msra.mxu0 %v1813
    %2316 = vmatpush.bf16.msra.mxu0 %v1803
    %2317 = vmatmul.bf16.gmra.mxu0 %v337
    %v2318 = vpop.f32.mrf.mxu0
    %v2319 = vadd.f32 %v2306, %v2318
    %v2320 = vpop.f32.mrf.mxu0
    %2321 = vdwg.mxu0
    %2322 = vmatpush.bf16.msra.mxu0 %v1953
    %2323 = vmatpush.bf16.msra.mxu0 %v1943
    %2324 = vmatpush.bf16.msra.mxu0 %v1933
    %2325 = vmatpush.bf16.msra.mxu0 %v1923
    %2326 = vmatpush.bf16.msra.mxu0 %v1913
    %2327 = vmatpush.bf16.msra.mxu0 %v1903
    %2328 = vmatpush.bf16.msra.mxu0 %v1893
    %2329 = vmatpush.bf16.msra.mxu0 %v1883
    %2330 = vmatmul.bf16.gmra.mxu0 %v338
    %v2331 = vpop.f32.mrf.mxu0
    %v2332 = vadd.f32 %v2319, %v2331
    %v2333 = vpop.f32.mrf.mxu0
    %2334 = vdwg.mxu0
    %2335 = vmatpush.bf16.msra.mxu0 %v1714
    %2336 = vmatpush.bf16.msra.mxu0 %v1704
    %2337 = vmatpush.bf16.msra.mxu0 %v1694
    %2338 = vmatpush.bf16.msra.mxu0 %v1684
    %2339 = vmatpush.bf16.msra.mxu0 %v1674
    %2340 = vmatpush.bf16.msra.mxu0 %v1664
    %2341 = vmatpush.bf16.msra.mxu0 %v1654
    %2342 = vmatpush.bf16.msra.mxu0 %v1644
    %2343 = vmatmul.bf16.gmra.mxu0 %v335
    %v2344 = vpop.f32.mrf.mxu0
    %v2345 = vadd.f32 %v664, %v2344
    %v2346 = vpop.f32.mrf.mxu0
    %2347 = vdwg.mxu0
    %2348 = vmatpush.bf16.msra.mxu0 %v1794
    %2349 = vmatpush.bf16.msra.mxu0 %v1784
    %2350 = vmatpush.bf16.msra.mxu0 %v1774
    %2351 = vmatpush.bf16.msra.mxu0 %v1764
    %2352 = vmatpush.bf16.msra.mxu0 %v1754
    %2353 = vmatpush.bf16.msra.mxu0 %v1744
    %2354 = vmatpush.bf16.msra.mxu0 %v1734
    %2355 = vmatpush.bf16.msra.mxu0 %v1724
    %2356 = vmatmul.bf16.gmra.mxu0 %v336
    %v2357 = vpop.f32.mrf.mxu0
    %v2358 = vadd.f32 %v2345, %v2357
    %v2359 = vpop.f32.mrf.mxu0
    %2360 = vdwg.mxu0
    %2361 = vmatpush.bf16.msra.mxu0 %v1874
    %2362 = vmatpush.bf16.msra.mxu0 %v1864
    %2363 = vmatpush.bf16.msra.mxu0 %v1854
    %2364 = vmatpush.bf16.msra.mxu0 %v1844
    %2365 = vmatpush.bf16.msra.mxu0 %v1834
    %2366 = vmatpush.bf16.msra.mxu0 %v1824
    %2367 = vmatpush.bf16.msra.mxu0 %v1814
    %2368 = vmatpush.bf16.msra.mxu0 %v1804
    %2369 = vmatmul.bf16.gmra.mxu0 %v337
    %v2370 = vpop.f32.mrf.mxu0
    %v2371 = vadd.f32 %v2358, %v2370
    %v2372 = vpop.f32.mrf.mxu0
    %2373 = vdwg.mxu0
    %2374 = vmatpush.bf16.msra.mxu0 %v1954
    %2375 = vmatpush.bf16.msra.mxu0 %v1944
    %2376 = vmatpush.bf16.msra.mxu0 %v1934
    %2377 = vmatpush.bf16.msra.mxu0 %v1924
    %2378 = vmatpush.bf16.msra.mxu0 %v1914
    %2379 = vmatpush.bf16.msra.mxu0 %v1904
    %2380 = vmatpush.bf16.msra.mxu0 %v1894
    %2381 = vmatpush.bf16.msra.mxu0 %v1884
    %2382 = vmatmul.bf16.gmra.mxu0 %v338
    %v2383 = vpop.f32.mrf.mxu0
    %v2384 = vadd.f32 %v2371, %v2383
    %v2385 = vpop.f32.mrf.mxu0
    %2386 = vdwg.mxu0
    %2387 = vmatpush.bf16.msra.mxu0 %v1715
    %2388 = vmatpush.bf16.msra.mxu0 %v1705
    %2389 = vmatpush.bf16.msra.mxu0 %v1695
    %2390 = vmatpush.bf16.msra.mxu0 %v1685
    %2391 = vmatpush.bf16.msra.mxu0 %v1675
    %2392 = vmatpush.bf16.msra.mxu0 %v1665
    %2393 = vmatpush.bf16.msra.mxu0 %v1655
    %2394 = vmatpush.bf16.msra.mxu0 %v1645
    %2395 = vmatmul.bf16.gmra.mxu0 %v335
    %v2396 = vpop.f32.mrf.mxu0
    %v2397 = vadd.f32 %v665, %v2396
    %v2398 = vpop.f32.mrf.mxu0
    %2399 = vdwg.mxu0
    %2400 = vmatpush.bf16.msra.mxu0 %v1795
    %2401 = vmatpush.bf16.msra.mxu0 %v1785
    %2402 = vmatpush.bf16.msra.mxu0 %v1775
    %2403 = vmatpush.bf16.msra.mxu0 %v1765
    %2404 = vmatpush.bf16.msra.mxu0 %v1755
    %2405 = vmatpush.bf16.msra.mxu0 %v1745
    %2406 = vmatpush.bf16.msra.mxu0 %v1735
    %2407 = vmatpush.bf16.msra.mxu0 %v1725
    %2408 = vmatmul.bf16.gmra.mxu0 %v336
    %v2409 = vpop.f32.mrf.mxu0
    %v2410 = vadd.f32 %v2397, %v2409
    %v2411 = vpop.f32.mrf.mxu0
    %2412 = vdwg.mxu0
    %2413 = vmatpush.bf16.msra.mxu0 %v1875
    %2414 = vmatpush.bf16.msra.mxu0 %v1865
    %2415 = vmatpush.bf16.msra.mxu0 %v1855
    %2416 = vmatpush.bf16.msra.mxu0 %v1845
    %2417 = vmatpush.bf16.msra.mxu0 %v1835
    %2418 = vmatpush.bf16.msra.mxu0 %v1825
    %2419 = vmatpush.bf16.msra.mxu0 %v1815
    %2420 = vmatpush.bf16.msra.mxu0 %v1805
    %2421 = vmatmul.bf16.gmra.mxu0 %v337
    %v2422 = vpop.f32.mrf.mxu0
    %v2423 = vadd.f32 %v2410, %v2422
    %v2424 = vpop.f32.mrf.mxu0
    %2425 = vdwg.mxu0
    %2426 = vmatpush.bf16.msra.mxu0 %v1955
    %2427 = vmatpush.bf16.msra.mxu0 %v1945
    %2428 = vmatpush.bf16.msra.mxu0 %v1935
    %2429 = vmatpush.bf16.msra.mxu0 %v1925
    %2430 = vmatpush.bf16.msra.mxu0 %v1915
    %2431 = vmatpush.bf16.msra.mxu0 %v1905
    %2432 = vmatpush.bf16.msra.mxu0 %v1895
    %2433 = vmatpush.bf16.msra.mxu0 %v1885
    %2434 = vmatmul.bf16.gmra.mxu0 %v338
    %v2435 = vpop.f32.mrf.mxu0
    %v2436 = vadd.f32 %v2423, %v2435
    %v2437 = vpop.f32.mrf.mxu0
    %2438 = vdwg.mxu0
    %2439 = vmatpush.bf16.msra.mxu0 %v1716
    %2440 = vmatpush.bf16.msra.mxu0 %v1706
    %2441 = vmatpush.bf16.msra.mxu0 %v1696
    %2442 = vmatpush.bf16.msra.mxu0 %v1686
    %2443 = vmatpush.bf16.msra.mxu0 %v1676
    %2444 = vmatpush.bf16.msra.mxu0 %v1666
    %2445 = vmatpush.bf16.msra.mxu0 %v1656
    %2446 = vmatpush.bf16.msra.mxu0 %v1646
    %2447 = vmatmul.bf16.gmra.mxu0 %v335
    %v2448 = vpop.f32.mrf.mxu0
    %v2449 = vadd.f32 %v666, %v2448
    %v2450 = vpop.f32.mrf.mxu0
    %2451 = vdwg.mxu0
    %2452 = vmatpush.bf16.msra.mxu0 %v1796
    %2453 = vmatpush.bf16.msra.mxu0 %v1786
    %2454 = vmatpush.bf16.msra.mxu0 %v1776
    %2455 = vmatpush.bf16.msra.mxu0 %v1766
    %2456 = vmatpush.bf16.msra.mxu0 %v1756
    %2457 = vmatpush.bf16.msra.mxu0 %v1746
    %2458 = vmatpush.bf16.msra.mxu0 %v1736
    %2459 = vmatpush.bf16.msra.mxu0 %v1726
    %2460 = vmatmul.bf16.gmra.mxu0 %v336
    %v2461 = vpop.f32.mrf.mxu0
    %v2462 = vadd.f32 %v2449, %v2461
    %v2463 = vpop.f32.mrf.mxu0
    %2464 = vdwg.mxu0
    %2465 = vmatpush.bf16.msra.mxu0 %v1876
    %2466 = vmatpush.bf16.msra.mxu0 %v1866
    %2467 = vmatpush.bf16.msra.mxu0 %v1856
    %2468 = vmatpush.bf16.msra.mxu0 %v1846
    %2469 = vmatpush.bf16.msra.mxu0 %v1836
    %2470 = vmatpush.bf16.msra.mxu0 %v1826
    %2471 = vmatpush.bf16.msra.mxu0 %v1816
    %2472 = vmatpush.bf16.msra.mxu0 %v1806
    %2473 = vmatmul.bf16.gmra.mxu0 %v337
    %v2474 = vpop.f32.mrf.mxu0
    %v2475 = vadd.f32 %v2462, %v2474
    %v2476 = vpop.f32.mrf.mxu0
    %2477 = vdwg.mxu0
    %2478 = vmatpush.bf16.msra.mxu0 %v1956
    %2479 = vmatpush.bf16.msra.mxu0 %v1946
    %2480 = vmatpush.bf16.msra.mxu0 %v1936
    %2481 = vmatpush.bf16.msra.mxu0 %v1926
    %2482 = vmatpush.bf16.msra.mxu0 %v1916
    %2483 = vmatpush.bf16.msra.mxu0 %v1906
    %2484 = vmatpush.bf16.msra.mxu0 %v1896
    %2485 = vmatpush.bf16.msra.mxu0 %v1886
    %2486 = vmatmul.bf16.gmra.mxu0 %v338
    %v2487 = vpop.f32.mrf.mxu0
    %v2488 = vadd.f32 %v2475, %v2487
    %v2489 = vpop.f32.mrf.mxu0
    %2490 = vdwg.mxu0
    %2491 = vmatpush.bf16.msra.mxu0 %v1717
    %2492 = vmatpush.bf16.msra.mxu0 %v1707
    %2493 = vmatpush.bf16.msra.mxu0 %v1697
    %2494 = vmatpush.bf16.msra.mxu0 %v1687
    %2495 = vmatpush.bf16.msra.mxu0 %v1677
    %2496 = vmatpush.bf16.msra.mxu0 %v1667
    %2497 = vmatpush.bf16.msra.mxu0 %v1657
    %2498 = vmatpush.bf16.msra.mxu0 %v1647
    %2499 = vmatmul.bf16.gmra.mxu0 %v335
    %v2500 = vpop.f32.mrf.mxu0
    %v2501 = vadd.f32 %v667, %v2500
    %v2502 = vpop.f32.mrf.mxu0
    %2503 = vdwg.mxu0
    %2504 = vmatpush.bf16.msra.mxu0 %v1797
    %2505 = vmatpush.bf16.msra.mxu0 %v1787
    %2506 = vmatpush.bf16.msra.mxu0 %v1777
    %2507 = vmatpush.bf16.msra.mxu0 %v1767
    %2508 = vmatpush.bf16.msra.mxu0 %v1757
    %2509 = vmatpush.bf16.msra.mxu0 %v1747
    %2510 = vmatpush.bf16.msra.mxu0 %v1737
    %2511 = vmatpush.bf16.msra.mxu0 %v1727
    %2512 = vmatmul.bf16.gmra.mxu0 %v336
    %v2513 = vpop.f32.mrf.mxu0
    %v2514 = vadd.f32 %v2501, %v2513
    %v2515 = vpop.f32.mrf.mxu0
    %2516 = vdwg.mxu0
    %2517 = vmatpush.bf16.msra.mxu0 %v1877
    %2518 = vmatpush.bf16.msra.mxu0 %v1867
    %2519 = vmatpush.bf16.msra.mxu0 %v1857
    %2520 = vmatpush.bf16.msra.mxu0 %v1847
    %2521 = vmatpush.bf16.msra.mxu0 %v1837
    %2522 = vmatpush.bf16.msra.mxu0 %v1827
    %2523 = vmatpush.bf16.msra.mxu0 %v1817
    %2524 = vmatpush.bf16.msra.mxu0 %v1807
    %2525 = vmatmul.bf16.gmra.mxu0 %v337
    %v2526 = vpop.f32.mrf.mxu0
    %v2527 = vadd.f32 %v2514, %v2526
    %v2528 = vpop.f32.mrf.mxu0
    %2529 = vdwg.mxu0
    %2530 = vmatpush.bf16.msra.mxu0 %v1957
    %2531 = vmatpush.bf16.msra.mxu0 %v1947
    %2532 = vmatpush.bf16.msra.mxu0 %v1937
    %2533 = vmatpush.bf16.msra.mxu0 %v1927
    %2534 = vmatpush.bf16.msra.mxu0 %v1917
    %2535 = vmatpush.bf16.msra.mxu0 %v1907
    %2536 = vmatpush.bf16.msra.mxu0 %v1897
    %2537 = vmatpush.bf16.msra.mxu0 %v1887
    %2538 = vmatmul.bf16.gmra.mxu0 %v338
    %v2539 = vpop.f32.mrf.mxu0
    %v2540 = vadd.f32 %v2527, %v2539
    %v2541 = vpop.f32.mrf.mxu0
    %2542 = vdwg.mxu0
    %2543 = vmatpush.bf16.msra.mxu0 %v1718
    %2544 = vmatpush.bf16.msra.mxu0 %v1708
    %2545 = vmatpush.bf16.msra.mxu0 %v1698
    %2546 = vmatpush.bf16.msra.mxu0 %v1688
    %2547 = vmatpush.bf16.msra.mxu0 %v1678
    %2548 = vmatpush.bf16.msra.mxu0 %v1668
    %2549 = vmatpush.bf16.msra.mxu0 %v1658
    %2550 = vmatpush.bf16.msra.mxu0 %v1648
    %2551 = vmatmul.bf16.gmra.mxu0 %v335
    %v2552 = vpop.f32.mrf.mxu0
    %v2553 = vadd.f32 %v668, %v2552
    %v2554 = vpop.f32.mrf.mxu0
    %2555 = vdwg.mxu0
    %2556 = vmatpush.bf16.msra.mxu0 %v1798
    %2557 = vmatpush.bf16.msra.mxu0 %v1788
    %2558 = vmatpush.bf16.msra.mxu0 %v1778
    %2559 = vmatpush.bf16.msra.mxu0 %v1768
    %2560 = vmatpush.bf16.msra.mxu0 %v1758
    %2561 = vmatpush.bf16.msra.mxu0 %v1748
    %2562 = vmatpush.bf16.msra.mxu0 %v1738
    %2563 = vmatpush.bf16.msra.mxu0 %v1728
    %2564 = vmatmul.bf16.gmra.mxu0 %v336
    %v2565 = vpop.f32.mrf.mxu0
    %v2566 = vadd.f32 %v2553, %v2565
    %v2567 = vpop.f32.mrf.mxu0
    %2568 = vdwg.mxu0
    %2569 = vmatpush.bf16.msra.mxu0 %v1878
    %2570 = vmatpush.bf16.msra.mxu0 %v1868
    %2571 = vmatpush.bf16.msra.mxu0 %v1858
    %2572 = vmatpush.bf16.msra.mxu0 %v1848
    %2573 = vmatpush.bf16.msra.mxu0 %v1838
    %2574 = vmatpush.bf16.msra.mxu0 %v1828
    %2575 = vmatpush.bf16.msra.mxu0 %v1818
    %2576 = vmatpush.bf16.msra.mxu0 %v1808
    %2577 = vmatmul.bf16.gmra.mxu0 %v337
    %v2578 = vpop.f32.mrf.mxu0
    %v2579 = vadd.f32 %v2566, %v2578
    %v2580 = vpop.f32.mrf.mxu0
    %2581 = vdwg.mxu0
    %2582 = vmatpush.bf16.msra.mxu0 %v1958
    %2583 = vmatpush.bf16.msra.mxu0 %v1948
    %2584 = vmatpush.bf16.msra.mxu0 %v1938
    %2585 = vmatpush.bf16.msra.mxu0 %v1928
    %2586 = vmatpush.bf16.msra.mxu0 %v1918
    %2587 = vmatpush.bf16.msra.mxu0 %v1908
    %2588 = vmatpush.bf16.msra.mxu0 %v1898
    %2589 = vmatpush.bf16.msra.mxu0 %v1888
    %2590 = vmatmul.bf16.gmra.mxu0 %v338
    %v2591 = vpop.f32.mrf.mxu0
    %v2592 = vadd.f32 %v2579, %v2591
    %v2593 = vpop.f32.mrf.mxu0
    %2594 = vdwg.mxu0
    %2595 = vmatpush.bf16.msra.mxu0 %v1719
    %2596 = vmatpush.bf16.msra.mxu0 %v1709
    %2597 = vmatpush.bf16.msra.mxu0 %v1699
    %2598 = vmatpush.bf16.msra.mxu0 %v1689
    %2599 = vmatpush.bf16.msra.mxu0 %v1679
    %2600 = vmatpush.bf16.msra.mxu0 %v1669
    %2601 = vmatpush.bf16.msra.mxu0 %v1659
    %2602 = vmatpush.bf16.msra.mxu0 %v1649
    %2603 = vmatmul.bf16.gmra.mxu0 %v335
    %v2604 = vpop.f32.mrf.mxu0
    %v2605 = vadd.f32 %v669, %v2604
    %v2606 = vpop.f32.mrf.mxu0
    %2607 = vdwg.mxu0
    %2608 = vmatpush.bf16.msra.mxu0 %v1799
    %2609 = vmatpush.bf16.msra.mxu0 %v1789
    %2610 = vmatpush.bf16.msra.mxu0 %v1779
    %2611 = vmatpush.bf16.msra.mxu0 %v1769
    %2612 = vmatpush.bf16.msra.mxu0 %v1759
    %2613 = vmatpush.bf16.msra.mxu0 %v1749
    %2614 = vmatpush.bf16.msra.mxu0 %v1739
    %2615 = vmatpush.bf16.msra.mxu0 %v1729
    %2616 = vmatmul.bf16.gmra.mxu0 %v336
    %v2617 = vpop.f32.mrf.mxu0
    %v2618 = vadd.f32 %v2605, %v2617
    %v2619 = vpop.f32.mrf.mxu0
    %2620 = vdwg.mxu0
    %2621 = vmatpush.bf16.msra.mxu0 %v1879
    %2622 = vmatpush.bf16.msra.mxu0 %v1869
    %2623 = vmatpush.bf16.msra.mxu0 %v1859
    %2624 = vmatpush.bf16.msra.mxu0 %v1849
    %2625 = vmatpush.bf16.msra.mxu0 %v1839
    %2626 = vmatpush.bf16.msra.mxu0 %v1829
    %2627 = vmatpush.bf16.msra.mxu0 %v1819
    %2628 = vmatpush.bf16.msra.mxu0 %v1809
    %2629 = vmatmul.bf16.gmra.mxu0 %v337
    %v2630 = vpop.f32.mrf.mxu0
    %v2631 = vadd.f32 %v2618, %v2630
    %v2632 = vpop.f32.mrf.mxu0
    %2633 = vdwg.mxu0
    %2634 = vmatpush.bf16.msra.mxu0 %v1959
    %2635 = vmatpush.bf16.msra.mxu0 %v1949
    %2636 = vmatpush.bf16.msra.mxu0 %v1939
    %2637 = vmatpush.bf16.msra.mxu0 %v1929
    %2638 = vmatpush.bf16.msra.mxu0 %v1919
    %2639 = vmatpush.bf16.msra.mxu0 %v1909
    %2640 = vmatpush.bf16.msra.mxu0 %v1899
    %2641 = vmatpush.bf16.msra.mxu0 %v1889
    %2642 = vmatmul.bf16.gmra.mxu0 %v338
    %v2643 = vpop.f32.mrf.mxu0
    %v2644 = vadd.f32 %v2631, %v2643
    %v2645 = vpop.f32.mrf.mxu0
    %2646 = vdwg.mxu0
    %2647 = vmatpush.bf16.msra.mxu0 %v1720
    %2648 = vmatpush.bf16.msra.mxu0 %v1710
    %2649 = vmatpush.bf16.msra.mxu0 %v1700
    %2650 = vmatpush.bf16.msra.mxu0 %v1690
    %2651 = vmatpush.bf16.msra.mxu0 %v1680
    %2652 = vmatpush.bf16.msra.mxu0 %v1670
    %2653 = vmatpush.bf16.msra.mxu0 %v1660
    %2654 = vmatpush.bf16.msra.mxu0 %v1650
    %2655 = vmatmul.bf16.gmra.mxu0 %v335
    %v2656 = vpop.f32.mrf.mxu0
    %v2657 = vadd.f32 %v670, %v2656
    %v2658 = vpop.f32.mrf.mxu0
    %2659 = vdwg.mxu0
    %2660 = vmatpush.bf16.msra.mxu0 %v1800
    %2661 = vmatpush.bf16.msra.mxu0 %v1790
    %2662 = vmatpush.bf16.msra.mxu0 %v1780
    %2663 = vmatpush.bf16.msra.mxu0 %v1770
    %2664 = vmatpush.bf16.msra.mxu0 %v1760
    %2665 = vmatpush.bf16.msra.mxu0 %v1750
    %2666 = vmatpush.bf16.msra.mxu0 %v1740
    %2667 = vmatpush.bf16.msra.mxu0 %v1730
    %2668 = vmatmul.bf16.gmra.mxu0 %v336
    %v2669 = vpop.f32.mrf.mxu0
    %v2670 = vadd.f32 %v2657, %v2669
    %v2671 = vpop.f32.mrf.mxu0
    %2672 = vdwg.mxu0
    %2673 = vmatpush.bf16.msra.mxu0 %v1880
    %2674 = vmatpush.bf16.msra.mxu0 %v1870
    %2675 = vmatpush.bf16.msra.mxu0 %v1860
    %2676 = vmatpush.bf16.msra.mxu0 %v1850
    %2677 = vmatpush.bf16.msra.mxu0 %v1840
    %2678 = vmatpush.bf16.msra.mxu0 %v1830
    %2679 = vmatpush.bf16.msra.mxu0 %v1820
    %2680 = vmatpush.bf16.msra.mxu0 %v1810
    %2681 = vmatmul.bf16.gmra.mxu0 %v337
    %v2682 = vpop.f32.mrf.mxu0
    %v2683 = vadd.f32 %v2670, %v2682
    %v2684 = vpop.f32.mrf.mxu0
    %2685 = vdwg.mxu0
    %2686 = vmatpush.bf16.msra.mxu0 %v1960
    %2687 = vmatpush.bf16.msra.mxu0 %v1950
    %2688 = vmatpush.bf16.msra.mxu0 %v1940
    %2689 = vmatpush.bf16.msra.mxu0 %v1930
    %2690 = vmatpush.bf16.msra.mxu0 %v1920
    %2691 = vmatpush.bf16.msra.mxu0 %v1910
    %2692 = vmatpush.bf16.msra.mxu0 %v1900
    %2693 = vmatpush.bf16.msra.mxu0 %v1890
    %2694 = vmatmul.bf16.gmra.mxu0 %v338
    %v2695 = vpop.f32.mrf.mxu0
    %v2696 = vadd.f32 %v2683, %v2695
    %v2697 = vpop.f32.mrf.mxu0
    %2698 = vdwg.mxu0
    %2699 = vmatpush.bf16.msra.mxu0 %v1721
    %2700 = vmatpush.bf16.msra.mxu0 %v1711
    %2701 = vmatpush.bf16.msra.mxu0 %v1701
    %2702 = vmatpush.bf16.msra.mxu0 %v1691
    %2703 = vmatpush.bf16.msra.mxu0 %v1681
    %2704 = vmatpush.bf16.msra.mxu0 %v1671
    %2705 = vmatpush.bf16.msra.mxu0 %v1661
    %2706 = vmatpush.bf16.msra.mxu0 %v1651
    %2707 = vmatmul.bf16.gmra.mxu0 %v335
    %v2708 = vpop.f32.mrf.mxu0
    %v2709 = vadd.f32 %v671, %v2708
    %v2710 = vpop.f32.mrf.mxu0
    %2711 = vdwg.mxu0
    %2712 = vmatpush.bf16.msra.mxu0 %v1801
    %2713 = vmatpush.bf16.msra.mxu0 %v1791
    %2714 = vmatpush.bf16.msra.mxu0 %v1781
    %2715 = vmatpush.bf16.msra.mxu0 %v1771
    %2716 = vmatpush.bf16.msra.mxu0 %v1761
    %2717 = vmatpush.bf16.msra.mxu0 %v1751
    %2718 = vmatpush.bf16.msra.mxu0 %v1741
    %2719 = vmatpush.bf16.msra.mxu0 %v1731
    %2720 = vmatmul.bf16.gmra.mxu0 %v336
    %v2721 = vpop.f32.mrf.mxu0
    %v2722 = vadd.f32 %v2709, %v2721
    %v2723 = vpop.f32.mrf.mxu0
    %2724 = vdwg.mxu0
    %2725 = vmatpush.bf16.msra.mxu0 %v1881
    %2726 = vmatpush.bf16.msra.mxu0 %v1871
    %2727 = vmatpush.bf16.msra.mxu0 %v1861
    %2728 = vmatpush.bf16.msra.mxu0 %v1851
    %2729 = vmatpush.bf16.msra.mxu0 %v1841
    %2730 = vmatpush.bf16.msra.mxu0 %v1831
    %2731 = vmatpush.bf16.msra.mxu0 %v1821
    %2732 = vmatpush.bf16.msra.mxu0 %v1811
    %2733 = vmatmul.bf16.gmra.mxu0 %v337
    %v2734 = vpop.f32.mrf.mxu0
    %v2735 = vadd.f32 %v2722, %v2734
    %v2736 = vpop.f32.mrf.mxu0
    %2737 = vdwg.mxu0
    %2738 = vmatpush.bf16.msra.mxu0 %v1961
    %2739 = vmatpush.bf16.msra.mxu0 %v1951
    %2740 = vmatpush.bf16.msra.mxu0 %v1941
    %2741 = vmatpush.bf16.msra.mxu0 %v1931
    %2742 = vmatpush.bf16.msra.mxu0 %v1921
    %2743 = vmatpush.bf16.msra.mxu0 %v1911
    %2744 = vmatpush.bf16.msra.mxu0 %v1901
    %2745 = vmatpush.bf16.msra.mxu0 %v1891
    %2746 = vmatmul.bf16.gmra.mxu0 %v338
    %v2747 = vpop.f32.mrf.mxu0
    %v2748 = vadd.f32 %v2735, %v2747
    %v2749 = vpop.f32.mrf.mxu0
    %2750 = vdwg.mxu0
    %2751 = vmatpush.bf16.msra.mxu0 %v1722
    %2752 = vmatpush.bf16.msra.mxu0 %v1712
    %2753 = vmatpush.bf16.msra.mxu0 %v1702
    %2754 = vmatpush.bf16.msra.mxu0 %v1692
    %2755 = vmatpush.bf16.msra.mxu0 %v1682
    %2756 = vmatpush.bf16.msra.mxu0 %v1672
    %2757 = vmatpush.bf16.msra.mxu0 %v1662
    %2758 = vmatpush.bf16.msra.mxu0 %v1652
    %2759 = vmatmul.bf16.gmra.mxu0 %v335
    %v2760 = vpop.f32.mrf.mxu0
    %v2761 = vadd.f32 %v672, %v2760
    %v2762 = vpop.f32.mrf.mxu0
    %2763 = vdwg.mxu0
    %2764 = vmatpush.bf16.msra.mxu0 %v1802
    %2765 = vmatpush.bf16.msra.mxu0 %v1792
    %2766 = vmatpush.bf16.msra.mxu0 %v1782
    %2767 = vmatpush.bf16.msra.mxu0 %v1772
    %2768 = vmatpush.bf16.msra.mxu0 %v1762
    %2769 = vmatpush.bf16.msra.mxu0 %v1752
    %2770 = vmatpush.bf16.msra.mxu0 %v1742
    %2771 = vmatpush.bf16.msra.mxu0 %v1732
    %2772 = vmatmul.bf16.gmra.mxu0 %v336
    %v2773 = vpop.f32.mrf.mxu0
    %v2774 = vadd.f32 %v2761, %v2773
    %v2775 = vpop.f32.mrf.mxu0
    %2776 = vdwg.mxu0
    %2777 = vmatpush.bf16.msra.mxu0 %v1882
    %2778 = vmatpush.bf16.msra.mxu0 %v1872
    %2779 = vmatpush.bf16.msra.mxu0 %v1862
    %2780 = vmatpush.bf16.msra.mxu0 %v1852
    %2781 = vmatpush.bf16.msra.mxu0 %v1842
    %2782 = vmatpush.bf16.msra.mxu0 %v1832
    %2783 = vmatpush.bf16.msra.mxu0 %v1822
    %2784 = vmatpush.bf16.msra.mxu0 %v1812
    %2785 = vmatmul.bf16.gmra.mxu0 %v337
    %v2786 = vpop.f32.mrf.mxu0
    %v2787 = vadd.f32 %v2774, %v2786
    %v2788 = vpop.f32.mrf.mxu0
    %2789 = vdwg.mxu0
    %2790 = vmatpush.bf16.msra.mxu0 %v1962
    %2791 = vmatpush.bf16.msra.mxu0 %v1952
    %2792 = vmatpush.bf16.msra.mxu0 %v1942
    %2793 = vmatpush.bf16.msra.mxu0 %v1932
    %2794 = vmatpush.bf16.msra.mxu0 %v1922
    %2795 = vmatpush.bf16.msra.mxu0 %v1912
    %2796 = vmatpush.bf16.msra.mxu0 %v1902
    %2797 = vmatpush.bf16.msra.mxu0 %v1892
    %2798 = vmatmul.bf16.gmra.mxu0 %v338
    %v2799 = vpop.f32.mrf.mxu0
    %v2800 = vadd.f32 %v2787, %v2799
    %v2801 = vpop.f32.mrf.mxu0
    %2802 = vdwg.mxu0
    %v2803 = vtanh.pop %v2332
    %v2804 = vtanh.pop %v2384
    %v2805 = vtanh.pop %v2436
    %v2806 = vtanh.pop %v2488
    %v2807 = vtanh.pop %v2540
    %v2808 = vtanh.pop %v2592
    %v2809 = vtanh.pop %v2644
    %v2810 = vtanh.pop %v2696
    %v2811 = vtanh.pop %v2748
    %v2812 = vtanh.pop %v2800
    %2813 = vst [vmem:[#allocation11] sm:$0xff] %v2803
    %2814 = vst [vmem:[#allocation11 + $0x8] sm:$0xff] %v2804
    %2815 = vst [vmem:[#allocation11 + $0x10] sm:$0xff] %v2805
    %2816 = vst [vmem:[#allocation11 + $0x18] sm:$0xff] %v2806
    %2817 = vst [vmem:[#allocation11 + $0x20] sm:$0xff] %v2807
    %2818 = vst [vmem:[#allocation11 + $0x28] sm:$0xff] %v2808
    %2819 = vst [vmem:[#allocation11 + $0x30] sm:$0xff] %v2809
    %2820 = vst [vmem:[#allocation11 + $0x38] sm:$0xff] %v2810
    %2821 = vst [vmem:[#allocation11 + $0x40] sm:$0xff] %v2811
    %vm2822 = vcmask 392192
    %2823 = vst.msk [vmem:[#allocation11 + $0x48] sm:$0xff] %vm2822, %v2812
    // Predicated region
    $region42: #{tpu_custom_call.1} parent=1 // pred_check
      _
    $region43: #{tpu_custom_call.1} parent=1 // pred_check_branch
      %2825 = sbr.rel (0) target = $region45
    $region44: #{tpu_custom_call.1} parent=1 // pred_region
      %2827 = vsyncadd [#allocation4], 0
      %s2829 = sshll.u32 [#allocation11], 4
      %s2830 = int_to_ptr.vmem [resolvable:$true] %s2829
      %s2831 = sshll.u32 %s5, 4
      %s2832 = int_to_ptr.hbm [resolvable:$true] %s2831
      %2834 = dma.vmem_to_hbm [thread:$0]  %s2830, 1280, %s2832, [#allocation4]
    $region45: #{tpu_custom_call.1} parent=1 // pred_fallthru
      _
    // Predicated region
    $region46: #{tpu_custom_call.1} parent=1 // pred_check
      _
    $region47: #{tpu_custom_call.1} parent=1 // pred_check_branch
      %2836 = sbr.rel (0) target = $region49
    $region48: #{tpu_custom_call.1} parent=1 // pred_region
      %2838 = dma.done [#allocation4], 1280
    $region49: #{tpu_custom_call.1} parent=1 // pred_fallthru
      _
    %2839 = vsyncpa [#allocation3], 1
    %2840 = vsyncpa [#allocation6], 1
    %2841 = vsyncpa [#allocation9], 1
    %2842 = vsyncpa [#allocation4], 1

</llo_original>
